<compile_context>
chip_gen: v7x
topology: tpu7x:2x2x1
jax: 0.10.0
libtpu: 0.0.40
codegen_flags: <defaults>
</compile_context>

<pallas_src>
import functools

import jax
import jax.numpy as jnp
from jax.experimental import pallas as pl
from jax.experimental.pallas import tpu as pltpu


LANE = 128      # lanes per vreg; gate / class blocks padded to this width
SUBLANE = 8     # sublanes per vreg; batch padded to a multiple of this
NEG_BIG = -1e30  # bias for padded logit columns -> never win the softmax


# ----------------------------------------------------------------------------
# Pallas kernel: entire forward pass lives in VMEM.
# ----------------------------------------------------------------------------
def _decoder_kernel(x_ref, wih_ref, whh_ref, bi_ref, bhn_ref, wc_ref, bc_ref,
                    out_ref, h_scr, *, max_length, hp):
    """
    x_ref  : (Bp, D)      input features (batch padded to sublane multiple)
    wih_ref: (D, 3*Hp)    input->gate weights, gate blocks lane-aligned [r|z|n]
    whh_ref: (Hp, 3*Hp)   hidden->gate weights, gate blocks lane-aligned
    bi_ref : (1, 3*Hp)    b_ih with b_hh folded into the r/z blocks
    bhn_ref: (1, Hp)      b_hh for the n gate (must stay inside the r* term)
    wc_ref : (Hp, Cp)     classifier weight (zero padded)
    bc_ref : (1, Cp)      classifier bias, padded lanes at -1e30
    out_ref: (T*Bp, Cp)   time-major log-softmax rows (lane/sublane dense)
    h_scr  : (T, Bp, Hp)  VMEM scratch holding every hidden state
    """
    Hp = hp
    Bp = x_ref.shape[0]

    x = x_ref[...]
    wih = wih_ref[...]
    whh = whh_ref[...]
    bi = bi_ref[...]

    # torch.stack([x]*T, dim=1) feeds the SAME x at every timestep, so the
    # input-gate contribution (plus the r/z hidden biases) is computed once.
    gx = jnp.dot(x, wih, preferred_element_type=jnp.float32) + bi       # (Bp, 3Hp)
    gx_r = gx[:, 0:Hp]
    gx_z = gx[:, Hp:2 * Hp]
    gx_n = gx[:, 2 * Hp:3 * Hp]

    # Hoist the n-gate hidden-bias broadcast out of the unrolled loop
    # (JAX does not CSE broadcast_in_dim inside an unrolled loop).
    bhn = jnp.broadcast_to(bhn_ref[...], (Bp, Hp))

    h = jnp.zeros((Bp, Hp), jnp.float32)

    # Recurrence only: one MXU dot + VPU/EUP gate math per step.  Classifier
    # and log-softmax are hoisted into a single batched epilogue below.
    # TODO(synk): w_hh could be held resident in MXU weight registers across
    # steps via pltpu.matmul_push_rhs / matmul_acc_lhs; kept as jnp.dot for
    # portability across v5e/v6e/v7x lowering.
    for t in range(max_length):
        gh = jnp.dot(h, whh, preferred_element_type=jnp.float32)        # (Bp, 3Hp)
        r = jax.nn.sigmoid(gx_r + gh[:, 0:Hp])
        z = jax.nn.sigmoid(gx_z + gh[:, Hp:2 * Hp])
        n = jnp.tanh(gx_n + r * (gh[:, 2 * Hp:3 * Hp] + bhn))
        h = (1.0 - z) * n + z * h                                        # (Bp, Hp)
        h_scr[t] = h                                                     # full-vreg vst

    # Epilogue: ONE (T*Bp, Hp) x (Hp, Cp) matmul, ONE vectorized log-softmax,
    # ONE lane-dense store amortized over all timesteps.
    h_all = h_scr[...].reshape(max_length * Bp, Hp)
    logits = jnp.dot(h_all, wc_ref[...], preferred_element_type=jnp.float32)
    logits = logits + bc_ref[...]                                        # (T*Bp, Cp)
    m = jnp.max(logits, axis=-1, keepdims=True)
    lse = jnp.log(jnp.sum(jnp.exp(logits - m), axis=-1, keepdims=True)) + m
    out_ref[...] = logits - lse


# ----------------------------------------------------------------------------
# Wrapper: parameter layout plumbing (lane-aligned gate blocks, padded batch /
# class lanes, bias folding) + pallas_call.
# ----------------------------------------------------------------------------
def _round_up(v, m):
    return ((v + m - 1) // m) * m


def sequential_decoder_forward(x, params, max_length):
    w_ih = params["w_ih"]     # (3H, D)  PyTorch GRU weight_ih_l0, blocks [r|z|n]
    w_hh = params["w_hh"]     # (3H, H)  PyTorch GRU weight_hh_l0
    b_ih = params["b_ih"]     # (3H,)
    b_hh = params["b_hh"]     # (3H,)
    w_c = params["w_c"]       # (C, H)   Linear weight
    b_c = params["b_c"]       # (C,)

    B, D = x.shape
    H = w_hh.shape[1]
    C = w_c.shape[0]

    Bp = _round_up(max(B, SUBLANE), SUBLANE)   # sublane-aligned batch
    Hp = _round_up(H, LANE)                    # lane-aligned gate block width
    Cp = _round_up(C, LANE)                    # lane-aligned class width

    f32 = jnp.float32

    # Batch padded with zero rows (results for those rows are sliced away).
    x_pad = jnp.zeros((Bp, D), f32).at[:B, :].set(x.astype(f32))

    # Gate blocks placed on 128-lane boundaries: [r | z | n] at offsets 0/Hp/2Hp.
    # Zero padding keeps the padded hidden columns exactly zero for all steps.
    wih_pad = jnp.zeros((D, 3 * Hp), f32)
    whh_pad = jnp.zeros((Hp, 3 * Hp), f32)
    for g in range(3):
        wih_pad = wih_pad.at[:, g * Hp:g * Hp + H].set(
            w_ih[g * H:(g + 1) * H, :].T.astype(f32))
        whh_pad = whh_pad.at[:H, g * Hp:g * Hp + H].set(
            w_hh[g * H:(g + 1) * H, :].T.astype(f32))

    # Fold b_hh into the r/z input biases; b_hh(n) must stay inside the r* term.
    bi_pad = jnp.zeros((1, 3 * Hp), f32)
    bi_pad = bi_pad.at[0, 0:H].set((b_ih[0:H] + b_hh[0:H]).astype(f32))
    bi_pad = bi_pad.at[0, Hp:Hp + H].set((b_ih[H:2 * H] + b_hh[H:2 * H]).astype(f32))
    bi_pad = bi_pad.at[0, 2 * Hp:2 * Hp + H].set(b_ih[2 * H:3 * H].astype(f32))
    bhn_pad = jnp.zeros((1, Hp), f32).at[0, 0:H].set(b_hh[2 * H:3 * H].astype(f32))

    # Classifier padded to full lanes; padded logit columns get a huge negative
    # bias so they never affect the softmax.
    wc_pad = jnp.zeros((Hp, Cp), f32).at[:H, :C].set(w_c.T.astype(f32))
    bc_pad = jnp.full((1, Cp), NEG_BIG, f32).at[0, :C].set(b_c.astype(f32))

    kernel = functools.partial(_decoder_kernel, max_length=max_length, hp=Hp)

    vmem = pl.BlockSpec(memory_space=pltpu.MemorySpace.VMEM)
    out_flat = pl.pallas_call(
        kernel,
        out_shape=jax.ShapeDtypeStruct((max_length * Bp, Cp), f32),
        in_specs=[vmem] * 7,
        out_specs=vmem,
        scratch_shapes=[pltpu.VMEM((max_length, Bp, Hp), f32)],
    )(x_pad, wih_pad, whh_pad, bi_pad, bhn_pad, wc_pad, bc_pad)

    out = out_flat.reshape(max_length, Bp, Cp)[:, :B, :C]   # (T, B, C)
    return jnp.transpose(out, (1, 0, 2))                    # (B, T, C)


# ----------------------------------------------------------------------------
# Pure-JAX reference of the PyTorch forward, for verification.
# ----------------------------------------------------------------------------
def reference_forward(x, params, max_length):
    w_ih, w_hh = params["w_ih"], params["w_hh"]
    b_ih, b_hh = params["b_ih"], params["b_hh"]
    w_c, b_c = params["w_c"], params["b_c"]
    H = w_hh.shape[1]
    B = x.shape[0]
    h = jnp.zeros((B, H), jnp.float32)
    outs = []
    for _ in range(max_length):
        gx = x @ w_ih.T + b_ih
        gh = h @ w_hh.T + b_hh
        r = jax.nn.sigmoid(gx[:, :H] + gh[:, :H])
        z = jax.nn.sigmoid(gx[:, H:2 * H] + gh[:, H:2 * H])
        n = jnp.tanh(gx[:, 2 * H:] + r * gh[:, 2 * H:])
        h = (1.0 - z) * n + z * h
        logits = h @ w_c.T + b_c
        outs.append(jax.nn.log_softmax(logits, axis=1))
    return jnp.stack(outs, axis=1)


# ----------------------------------------------------------------------------
# Deterministic parameter init (PyTorch-style uniform(-1/sqrt(H), 1/sqrt(H))).
# ----------------------------------------------------------------------------
def init_params(key, input_size, hidden_size, num_classes):
    H = hidden_size
    k = 1.0 / jnp.sqrt(jnp.float32(H))
    keys = jax.random.split(key, 6)
    uni = lambda kk, shape: jax.random.uniform(kk, shape, jnp.float32, -k, k)
    return {
        "w_ih": uni(keys[0], (3 * H, input_size)),
        "w_hh": uni(keys[1], (3 * H, H)),
        "b_ih": uni(keys[2], (3 * H,)),
        "b_hh": uni(keys[3], (3 * H,)),
        "w_c": uni(keys[4], (num_classes, H)),
        "b_c": uni(keys[5], (num_classes,)),
    }


if __name__ == "__main__":
    B, D, H, C, T = 2, 16, 32, 8, 10   # batch, input_size, hidden_size, len(field), max_length

    key = jax.random.PRNGKey(0)
    pkey, xkey = jax.random.split(key)
    params = init_params(pkey, D, H, C)
    x = jax.random.normal(xkey, (B, D), jnp.float32)

    out = sequential_decoder_forward(x, params, T)
    out = jax.block_until_ready(out)

    ref = reference_forward(x, params, T)
    assert out.shape == (B, T, C), out.shape
    assert jnp.allclose(out, ref, rtol=1e-3, atol=1e-3), "mismatch vs reference"

    print("KERNEL_OK")
</pallas_src>

<mosaic_0001>
module attributes {stable_mosaic.version = 11 : i64} {
  func.func @_decoder_kernel(%arg0: memref<8x16xf32, #tpu.memory_space<vmem>>, %arg1: memref<16x384xf32, #tpu.memory_space<vmem>>, %arg2: memref<128x384xf32, #tpu.memory_space<vmem>>, %arg3: memref<1x384xf32, #tpu.memory_space<vmem>>, %arg4: memref<1x128xf32, #tpu.memory_space<vmem>>, %arg5: memref<128x128xf32, #tpu.memory_space<vmem>>, %arg6: memref<1x128xf32, #tpu.memory_space<vmem>>, %arg7: memref<80x128xf32, #tpu.memory_space<vmem>>, %arg8: memref<10x8x128xf32, #tpu.memory_space<vmem>>) attributes {dimension_semantics = [], scalar_prefetch = 0 : i64, scratch_operands = 1 : i64, tpu.core_type = #tpu.core_type<tc>} {
    %c0 = arith.constant 0 : index
    %c0_0 = arith.constant 0 : index
    %0 = vector.load %arg0[%c0, %c0_0] : memref<8x16xf32, #tpu.memory_space<vmem>>, vector<8x16xf32>
    %c0_1 = arith.constant 0 : index
    %c0_2 = arith.constant 0 : index
    %1 = vector.load %arg1[%c0_1, %c0_2] : memref<16x384xf32, #tpu.memory_space<vmem>>, vector<16x384xf32>
    %c0_3 = arith.constant 0 : index
    %c0_4 = arith.constant 0 : index
    %2 = vector.load %arg2[%c0_3, %c0_4] : memref<128x384xf32, #tpu.memory_space<vmem>>, vector<128x384xf32>
    %c0_5 = arith.constant 0 : index
    %c0_6 = arith.constant 0 : index
    %3 = vector.load %arg3[%c0_5, %c0_6] : memref<1x384xf32, #tpu.memory_space<vmem>>, vector<1x384xf32>
    %cst = arith.constant dense<0.000000e+00> : vector<8x384xf32>
    %4 = tpu.matmul %0, %1, %cst {dimension_numbers = #tpu.dot_dimension_numbers<[1], [0], [0], [1], [0, 0, 1, 1], [], []>} : vector<8x16xf32>, vector<16x384xf32>, vector<8x384xf32> -> vector<8x384xf32>
    %5 = vector.broadcast %3 : vector<1x384xf32> to vector<8x384xf32>
    %6 = arith.addf %4, %5 : vector<8x384xf32>
    %7 = vector.extract_strided_slice %6 {offsets = [0, 0], sizes = [8, 128], strides = [1, 1]} : vector<8x384xf32> to vector<8x128xf32>
    %8 = vector.extract_strided_slice %6 {offsets = [0, 128], sizes = [8, 128], strides = [1, 1]} : vector<8x384xf32> to vector<8x128xf32>
    %9 = vector.extract_strided_slice %6 {offsets = [0, 256], sizes = [8, 128], strides = [1, 1]} : vector<8x384xf32> to vector<8x128xf32>
    %c0_7 = arith.constant 0 : index
    %c0_8 = arith.constant 0 : index
    %10 = vector.load %arg4[%c0_7, %c0_8] : memref<1x128xf32, #tpu.memory_space<vmem>>, vector<1x128xf32>
    %11 = vector.shape_cast %10 : vector<1x128xf32> to vector<1x128xf32>
    %12 = vector.broadcast %11 : vector<1x128xf32> to vector<8x128xf32>
    %cst_9 = arith.constant 0.000000e+00 : f32
    %13 = vector.broadcast %cst_9 : f32 to vector<8x128xf32>
    %cst_10 = arith.constant dense<0.000000e+00> : vector<8x384xf32>
    %14 = tpu.matmul %13, %2, %cst_10 {dimension_numbers = #tpu.dot_dimension_numbers<[1], [0], [0], [1], [0, 0, 1, 1], [], []>} : vector<8x128xf32>, vector<128x384xf32>, vector<8x384xf32> -> vector<8x384xf32>
    %15 = vector.extract_strided_slice %14 {offsets = [0, 0], sizes = [8, 128], strides = [1, 1]} : vector<8x384xf32> to vector<8x128xf32>
    %16 = arith.addf %7, %15 : vector<8x128xf32>
    %17 = arith.negf %16 : vector<8x128xf32>
    %18 = math.exp %17 : vector<8x128xf32>
    %cst_11 = arith.constant 1.000000e+00 : f32
    %19 = vector.broadcast %cst_11 : f32 to vector<8x128xf32>
    %20 = arith.addf %19, %18 : vector<8x128xf32>
    %21 = arith.divf %19, %20 : vector<8x128xf32>
    %22 = vector.extract_strided_slice %14 {offsets = [0, 128], sizes = [8, 128], strides = [1, 1]} : vector<8x384xf32> to vector<8x128xf32>
    %23 = arith.addf %8, %22 : vector<8x128xf32>
    %24 = arith.negf %23 : vector<8x128xf32>
    %25 = math.exp %24 : vector<8x128xf32>
    %cst_12 = arith.constant 1.000000e+00 : f32
    %26 = vector.broadcast %cst_12 : f32 to vector<8x128xf32>
    %27 = arith.addf %26, %25 : vector<8x128xf32>
    %28 = arith.divf %26, %27 : vector<8x128xf32>
    %29 = vector.extract_strided_slice %14 {offsets = [0, 256], sizes = [8, 128], strides = [1, 1]} : vector<8x384xf32> to vector<8x128xf32>
    %30 = arith.addf %29, %12 : vector<8x128xf32>
    %31 = arith.mulf %21, %30 : vector<8x128xf32>
    %32 = arith.addf %9, %31 : vector<8x128xf32>
    %33 = math.tanh %32 : vector<8x128xf32>
    %cst_13 = arith.constant 1.000000e+00 : f32
    %34 = vector.broadcast %cst_13 : f32 to vector<8x128xf32>
    %35 = arith.subf %34, %28 : vector<8x128xf32>
    %36 = arith.mulf %35, %33 : vector<8x128xf32>
    %37 = arith.mulf %28, %13 : vector<8x128xf32>
    %38 = arith.addf %36, %37 : vector<8x128xf32>
    %c0_14 = arith.constant 0 : index
    %c0_15 = arith.constant 0 : index
    %c0_16 = arith.constant 0 : index
    %39 = vector.load %arg8[%c0_14, %c0_15, %c0_16] : memref<10x8x128xf32, #tpu.memory_space<vmem>>, vector<1x8x128xf32>
    %40 = vector.shape_cast %39 : vector<1x8x128xf32> to vector<8x128xf32>
    %41 = vector.shape_cast %38 : vector<8x128xf32> to vector<1x8x128xf32>
    tpu.vector_store %arg8[%c0_14, %c0_15, %c0_16], %41 {strides = array<i32>} : memref<10x8x128xf32, #tpu.memory_space<vmem>>, vector<1x8x128xf32>,
    %cst_17 = arith.constant dense<0.000000e+00> : vector<8x384xf32>
    %42 = tpu.matmul %38, %2, %cst_17 {dimension_numbers = #tpu.dot_dimension_numbers<[1], [0], [0], [1], [0, 0, 1, 1], [], []>} : vector<8x128xf32>, vector<128x384xf32>, vector<8x384xf32> -> vector<8x384xf32>
    %43 = vector.extract_strided_slice %42 {offsets = [0, 0], sizes = [8, 128], strides = [1, 1]} : vector<8x384xf32> to vector<8x128xf32>
    %44 = arith.addf %7, %43 : vector<8x128xf32>
    %45 = arith.negf %44 : vector<8x128xf32>
    %46 = math.exp %45 : vector<8x128xf32>
    %cst_18 = arith.constant 1.000000e+00 : f32
    %47 = vector.broadcast %cst_18 : f32 to vector<8x128xf32>
    %48 = arith.addf %47, %46 : vector<8x128xf32>
    %49 = arith.divf %47, %48 : vector<8x128xf32>
    %50 = vector.extract_strided_slice %42 {offsets = [0, 128], sizes = [8, 128], strides = [1, 1]} : vector<8x384xf32> to vector<8x128xf32>
    %51 = arith.addf %8, %50 : vector<8x128xf32>
    %52 = arith.negf %51 : vector<8x128xf32>
    %53 = math.exp %52 : vector<8x128xf32>
    %cst_19 = arith.constant 1.000000e+00 : f32
    %54 = vector.broadcast %cst_19 : f32 to vector<8x128xf32>
    %55 = arith.addf %54, %53 : vector<8x128xf32>
    %56 = arith.divf %54, %55 : vector<8x128xf32>
    %57 = vector.extract_strided_slice %42 {offsets = [0, 256], sizes = [8, 128], strides = [1, 1]} : vector<8x384xf32> to vector<8x128xf32>
    %58 = arith.addf %57, %12 : vector<8x128xf32>
    %59 = arith.mulf %49, %58 : vector<8x128xf32>
    %60 = arith.addf %9, %59 : vector<8x128xf32>
    %61 = math.tanh %60 : vector<8x128xf32>
    %cst_20 = arith.constant 1.000000e+00 : f32
    %62 = vector.broadcast %cst_20 : f32 to vector<8x128xf32>
    %63 = arith.subf %62, %56 : vector<8x128xf32>
    %64 = arith.mulf %63, %61 : vector<8x128xf32>
    %65 = arith.mulf %56, %38 : vector<8x128xf32>
    %66 = arith.addf %64, %65 : vector<8x128xf32>
    %c1 = arith.constant 1 : index
    %c0_21 = arith.constant 0 : index
    %c0_22 = arith.constant 0 : index
    %67 = vector.load %arg8[%c1, %c0_21, %c0_22] : memref<10x8x128xf32, #tpu.memory_space<vmem>>, vector<1x8x128xf32>
    %68 = vector.shape_cast %67 : vector<1x8x128xf32> to vector<8x128xf32>
    %69 = vector.shape_cast %66 : vector<8x128xf32> to vector<1x8x128xf32>
    tpu.vector_store %arg8[%c1, %c0_21, %c0_22], %69 {strides = array<i32>} : memref<10x8x128xf32, #tpu.memory_space<vmem>>, vector<1x8x128xf32>,
    %cst_23 = arith.constant dense<0.000000e+00> : vector<8x384xf32>
    %70 = tpu.matmul %66, %2, %cst_23 {dimension_numbers = #tpu.dot_dimension_numbers<[1], [0], [0], [1], [0, 0, 1, 1], [], []>} : vector<8x128xf32>, vector<128x384xf32>, vector<8x384xf32> -> vector<8x384xf32>
    %71 = vector.extract_strided_slice %70 {offsets = [0, 0], sizes = [8, 128], strides = [1, 1]} : vector<8x384xf32> to vector<8x128xf32>
    %72 = arith.addf %7, %71 : vector<8x128xf32>
    %73 = arith.negf %72 : vector<8x128xf32>
    %74 = math.exp %73 : vector<8x128xf32>
    %cst_24 = arith.constant 1.000000e+00 : f32
    %75 = vector.broadcast %cst_24 : f32 to vector<8x128xf32>
    %76 = arith.addf %75, %74 : vector<8x128xf32>
    %77 = arith.divf %75, %76 : vector<8x128xf32>
    %78 = vector.extract_strided_slice %70 {offsets = [0, 128], sizes = [8, 128], strides = [1, 1]} : vector<8x384xf32> to vector<8x128xf32>
    %79 = arith.addf %8, %78 : vector<8x128xf32>
    %80 = arith.negf %79 : vector<8x128xf32>
    %81 = math.exp %80 : vector<8x128xf32>
    %cst_25 = arith.constant 1.000000e+00 : f32
    %82 = vector.broadcast %cst_25 : f32 to vector<8x128xf32>
    %83 = arith.addf %82, %81 : vector<8x128xf32>
    %84 = arith.divf %82, %83 : vector<8x128xf32>
    %85 = vector.extract_strided_slice %70 {offsets = [0, 256], sizes = [8, 128], strides = [1, 1]} : vector<8x384xf32> to vector<8x128xf32>
    %86 = arith.addf %85, %12 : vector<8x128xf32>
    %87 = arith.mulf %77, %86 : vector<8x128xf32>
    %88 = arith.addf %9, %87 : vector<8x128xf32>
    %89 = math.tanh %88 : vector<8x128xf32>
    %cst_26 = arith.constant 1.000000e+00 : f32
    %90 = vector.broadcast %cst_26 : f32 to vector<8x128xf32>
    %91 = arith.subf %90, %84 : vector<8x128xf32>
    %92 = arith.mulf %91, %89 : vector<8x128xf32>
    %93 = arith.mulf %84, %66 : vector<8x128xf32>
    %94 = arith.addf %92, %93 : vector<8x128xf32>
    %c2 = arith.constant 2 : index
    %c0_27 = arith.constant 0 : index
    %c0_28 = arith.constant 0 : index
    %95 = vector.load %arg8[%c2, %c0_27, %c0_28] : memref<10x8x128xf32, #tpu.memory_space<vmem>>, vector<1x8x128xf32>
    %96 = vector.shape_cast %95 : vector<1x8x128xf32> to vector<8x128xf32>
    %97 = vector.shape_cast %94 : vector<8x128xf32> to vector<1x8x128xf32>
    tpu.vector_store %arg8[%c2, %c0_27, %c0_28], %97 {strides = array<i32>} : memref<10x8x128xf32, #tpu.memory_space<vmem>>, vector<1x8x128xf32>,
    %cst_29 = arith.constant dense<0.000000e+00> : vector<8x384xf32>
    %98 = tpu.matmul %94, %2, %cst_29 {dimension_numbers = #tpu.dot_dimension_numbers<[1], [0], [0], [1], [0, 0, 1, 1], [], []>} : vector<8x128xf32>, vector<128x384xf32>, vector<8x384xf32> -> vector<8x384xf32>
    %99 = vector.extract_strided_slice %98 {offsets = [0, 0], sizes = [8, 128], strides = [1, 1]} : vector<8x384xf32> to vector<8x128xf32>
    %100 = arith.addf %7, %99 : vector<8x128xf32>
    %101 = arith.negf %100 : vector<8x128xf32>
    %102 = math.exp %101 : vector<8x128xf32>
    %cst_30 = arith.constant 1.000000e+00 : f32
    %103 = vector.broadcast %cst_30 : f32 to vector<8x128xf32>
    %104 = arith.addf %103, %102 : vector<8x128xf32>
    %105 = arith.divf %103, %104 : vector<8x128xf32>
    %106 = vector.extract_strided_slice %98 {offsets = [0, 128], sizes = [8, 128], strides = [1, 1]} : vector<8x384xf32> to vector<8x128xf32>
    %107 = arith.addf %8, %106 : vector<8x128xf32>
    %108 = arith.negf %107 : vector<8x128xf32>
    %109 = math.exp %108 : vector<8x128xf32>
    %cst_31 = arith.constant 1.000000e+00 : f32
    %110 = vector.broadcast %cst_31 : f32 to vector<8x128xf32>
    %111 = arith.addf %110, %109 : vector<8x128xf32>
    %112 = arith.divf %110, %111 : vector<8x128xf32>
    %113 = vector.extract_strided_slice %98 {offsets = [0, 256], sizes = [8, 128], strides = [1, 1]} : vector<8x384xf32> to vector<8x128xf32>
    %114 = arith.addf %113, %12 : vector<8x128xf32>
    %115 = arith.mulf %105, %114 : vector<8x128xf32>
    %116 = arith.addf %9, %115 : vector<8x128xf32>
    %117 = math.tanh %116 : vector<8x128xf32>
    %cst_32 = arith.constant 1.000000e+00 : f32
    %118 = vector.broadcast %cst_32 : f32 to vector<8x128xf32>
    %119 = arith.subf %118, %112 : vector<8x128xf32>
    %120 = arith.mulf %119, %117 : vector<8x128xf32>
    %121 = arith.mulf %112, %94 : vector<8x128xf32>
    %122 = arith.addf %120, %121 : vector<8x128xf32>
    %c3 = arith.constant 3 : index
    %c0_33 = arith.constant 0 : index
    %c0_34 = arith.constant 0 : index
    %123 = vector.load %arg8[%c3, %c0_33, %c0_34] : memref<10x8x128xf32, #tpu.memory_space<vmem>>, vector<1x8x128xf32>
    %124 = vector.shape_cast %123 : vector<1x8x128xf32> to vector<8x128xf32>
    %125 = vector.shape_cast %122 : vector<8x128xf32> to vector<1x8x128xf32>
    tpu.vector_store %arg8[%c3, %c0_33, %c0_34], %125 {strides = array<i32>} : memref<10x8x128xf32, #tpu.memory_space<vmem>>, vector<1x8x128xf32>,
    %cst_35 = arith.constant dense<0.000000e+00> : vector<8x384xf32>
    %126 = tpu.matmul %122, %2, %cst_35 {dimension_numbers = #tpu.dot_dimension_numbers<[1], [0], [0], [1], [0, 0, 1, 1], [], []>} : vector<8x128xf32>, vector<128x384xf32>, vector<8x384xf32> -> vector<8x384xf32>
    %127 = vector.extract_strided_slice %126 {offsets = [0, 0], sizes = [8, 128], strides = [1, 1]} : vector<8x384xf32> to vector<8x128xf32>
    %128 = arith.addf %7, %127 : vector<8x128xf32>
    %129 = arith.negf %128 : vector<8x128xf32>
    %130 = math.exp %129 : vector<8x128xf32>
    %cst_36 = arith.constant 1.000000e+00 : f32
    %131 = vector.broadcast %cst_36 : f32 to vector<8x128xf32>
    %132 = arith.addf %131, %130 : vector<8x128xf32>
    %133 = arith.divf %131, %132 : vector<8x128xf32>
    %134 = vector.extract_strided_slice %126 {offsets = [0, 128], sizes = [8, 128], strides = [1, 1]} : vector<8x384xf32> to vector<8x128xf32>
    %135 = arith.addf %8, %134 : vector<8x128xf32>
    %136 = arith.negf %135 : vector<8x128xf32>
    %137 = math.exp %136 : vector<8x128xf32>
    %cst_37 = arith.constant 1.000000e+00 : f32
    %138 = vector.broadcast %cst_37 : f32 to vector<8x128xf32>
    %139 = arith.addf %138, %137 : vector<8x128xf32>
    %140 = arith.divf %138, %139 : vector<8x128xf32>
    %141 = vector.extract_strided_slice %126 {offsets = [0, 256], sizes = [8, 128], strides = [1, 1]} : vector<8x384xf32> to vector<8x128xf32>
    %142 = arith.addf %141, %12 : vector<8x128xf32>
    %143 = arith.mulf %133, %142 : vector<8x128xf32>
    %144 = arith.addf %9, %143 : vector<8x128xf32>
    %145 = math.tanh %144 : vector<8x128xf32>
    %cst_38 = arith.constant 1.000000e+00 : f32
    %146 = vector.broadcast %cst_38 : f32 to vector<8x128xf32>
    %147 = arith.subf %146, %140 : vector<8x128xf32>
    %148 = arith.mulf %147, %145 : vector<8x128xf32>
    %149 = arith.mulf %140, %122 : vector<8x128xf32>
    %150 = arith.addf %148, %149 : vector<8x128xf32>
    %c4 = arith.constant 4 : index
    %c0_39 = arith.constant 0 : index
    %c0_40 = arith.constant 0 : index
    %151 = vector.load %arg8[%c4, %c0_39, %c0_40] : memref<10x8x128xf32, #tpu.memory_space<vmem>>, vector<1x8x128xf32>
    %152 = vector.shape_cast %151 : vector<1x8x128xf32> to vector<8x128xf32>
    %153 = vector.shape_cast %150 : vector<8x128xf32> to vector<1x8x128xf32>
    tpu.vector_store %arg8[%c4, %c0_39, %c0_40], %153 {strides = array<i32>} : memref<10x8x128xf32, #tpu.memory_space<vmem>>, vector<1x8x128xf32>,
    %cst_41 = arith.constant dense<0.000000e+00> : vector<8x384xf32>
    %154 = tpu.matmul %150, %2, %cst_41 {dimension_numbers = #tpu.dot_dimension_numbers<[1], [0], [0], [1], [0, 0, 1, 1], [], []>} : vector<8x128xf32>, vector<128x384xf32>, vector<8x384xf32> -> vector<8x384xf32>
    %155 = vector.extract_strided_slice %154 {offsets = [0, 0], sizes = [8, 128], strides = [1, 1]} : vector<8x384xf32> to vector<8x128xf32>
    %156 = arith.addf %7, %155 : vector<8x128xf32>
    %157 = arith.negf %156 : vector<8x128xf32>
    %158 = math.exp %157 : vector<8x128xf32>
    %cst_42 = arith.constant 1.000000e+00 : f32
    %159 = vector.broadcast %cst_42 : f32 to vector<8x128xf32>
    %160 = arith.addf %159, %158 : vector<8x128xf32>
    %161 = arith.divf %159, %160 : vector<8x128xf32>
    %162 = vector.extract_strided_slice %154 {offsets = [0, 128], sizes = [8, 128], strides = [1, 1]} : vector<8x384xf32> to vector<8x128xf32>
    %163 = arith.addf %8, %162 : vector<8x128xf32>
    %164 = arith.negf %163 : vector<8x128xf32>
    %165 = math.exp %164 : vector<8x128xf32>
    %cst_43 = arith.constant 1.000000e+00 : f32
    %166 = vector.broadcast %cst_43 : f32 to vector<8x128xf32>
    %167 = arith.addf %166, %165 : vector<8x128xf32>
    %168 = arith.divf %166, %167 : vector<8x128xf32>
    %169 = vector.extract_strided_slice %154 {offsets = [0, 256], sizes = [8, 128], strides = [1, 1]} : vector<8x384xf32> to vector<8x128xf32>
    %170 = arith.addf %169, %12 : vector<8x128xf32>
    %171 = arith.mulf %161, %170 : vector<8x128xf32>
    %172 = arith.addf %9, %171 : vector<8x128xf32>
    %173 = math.tanh %172 : vector<8x128xf32>
    %cst_44 = arith.constant 1.000000e+00 : f32
    %174 = vector.broadcast %cst_44 : f32 to vector<8x128xf32>
    %175 = arith.subf %174, %168 : vector<8x128xf32>
    %176 = arith.mulf %175, %173 : vector<8x128xf32>
    %177 = arith.mulf %168, %150 : vector<8x128xf32>
    %178 = arith.addf %176, %177 : vector<8x128xf32>
    %c5 = arith.constant 5 : index
    %c0_45 = arith.constant 0 : index
    %c0_46 = arith.constant 0 : index
    %179 = vector.load %arg8[%c5, %c0_45, %c0_46] : memref<10x8x128xf32, #tpu.memory_space<vmem>>, vector<1x8x128xf32>
    %180 = vector.shape_cast %179 : vector<1x8x128xf32> to vector<8x128xf32>
    %181 = vector.shape_cast %178 : vector<8x128xf32> to vector<1x8x128xf32>
    tpu.vector_store %arg8[%c5, %c0_45, %c0_46], %181 {strides = array<i32>} : memref<10x8x128xf32, #tpu.memory_space<vmem>>, vector<1x8x128xf32>,
    %cst_47 = arith.constant dense<0.000000e+00> : vector<8x384xf32>
    %182 = tpu.matmul %178, %2, %cst_47 {dimension_numbers = #tpu.dot_dimension_numbers<[1], [0], [0], [1], [0, 0, 1, 1], [], []>} : vector<8x128xf32>, vector<128x384xf32>, vector<8x384xf32> -> vector<8x384xf32>
    %183 = vector.extract_strided_slice %182 {offsets = [0, 0], sizes = [8, 128], strides = [1, 1]} : vector<8x384xf32> to vector<8x128xf32>
    %184 = arith.addf %7, %183 : vector<8x128xf32>
    %185 = arith.negf %184 : vector<8x128xf32>
    %186 = math.exp %185 : vector<8x128xf32>
    %cst_48 = arith.constant 1.000000e+00 : f32
    %187 = vector.broadcast %cst_48 : f32 to vector<8x128xf32>
    %188 = arith.addf %187, %186 : vector<8x128xf32>
    %189 = arith.divf %187, %188 : vector<8x128xf32>
    %190 = vector.extract_strided_slice %182 {offsets = [0, 128], sizes = [8, 128], strides = [1, 1]} : vector<8x384xf32> to vector<8x128xf32>
    %191 = arith.addf %8, %190 : vector<8x128xf32>
    %192 = arith.negf %191 : vector<8x128xf32>
    %193 = math.exp %192 : vector<8x128xf32>
    %cst_49 = arith.constant 1.000000e+00 : f32
    %194 = vector.broadcast %cst_49 : f32 to vector<8x128xf32>
    %195 = arith.addf %194, %193 : vector<8x128xf32>
    %196 = arith.divf %194, %195 : vector<8x128xf32>
    %197 = vector.extract_strided_slice %182 {offsets = [0, 256], sizes = [8, 128], strides = [1, 1]} : vector<8x384xf32> to vector<8x128xf32>
    %198 = arith.addf %197, %12 : vector<8x128xf32>
    %199 = arith.mulf %189, %198 : vector<8x128xf32>
    %200 = arith.addf %9, %199 : vector<8x128xf32>
    %201 = math.tanh %200 : vector<8x128xf32>
    %cst_50 = arith.constant 1.000000e+00 : f32
    %202 = vector.broadcast %cst_50 : f32 to vector<8x128xf32>
    %203 = arith.subf %202, %196 : vector<8x128xf32>
    %204 = arith.mulf %203, %201 : vector<8x128xf32>
    %205 = arith.mulf %196, %178 : vector<8x128xf32>
    %206 = arith.addf %204, %205 : vector<8x128xf32>
    %c6 = arith.constant 6 : index
    %c0_51 = arith.constant 0 : index
    %c0_52 = arith.constant 0 : index
    %207 = vector.load %arg8[%c6, %c0_51, %c0_52] : memref<10x8x128xf32, #tpu.memory_space<vmem>>, vector<1x8x128xf32>
    %208 = vector.shape_cast %207 : vector<1x8x128xf32> to vector<8x128xf32>
    %209 = vector.shape_cast %206 : vector<8x128xf32> to vector<1x8x128xf32>
    tpu.vector_store %arg8[%c6, %c0_51, %c0_52], %209 {strides = array<i32>} : memref<10x8x128xf32, #tpu.memory_space<vmem>>, vector<1x8x128xf32>,
    %cst_53 = arith.constant dense<0.000000e+00> : vector<8x384xf32>
    %210 = tpu.matmul %206, %2, %cst_53 {dimension_numbers = #tpu.dot_dimension_numbers<[1], [0], [0], [1], [0, 0, 1, 1], [], []>} : vector<8x128xf32>, vector<128x384xf32>, vector<8x384xf32> -> vector<8x384xf32>
    %211 = vector.extract_strided_slice %210 {offsets = [0, 0], sizes = [8, 128], strides = [1, 1]} : vector<8x384xf32> to vector<8x128xf32>
    %212 = arith.addf %7, %211 : vector<8x128xf32>
    %213 = arith.negf %212 : vector<8x128xf32>
    %214 = math.exp %213 : vector<8x128xf32>
    %cst_54 = arith.constant 1.000000e+00 : f32
    %215 = vector.broadcast %cst_54 : f32 to vector<8x128xf32>
    %216 = arith.addf %215, %214 : vector<8x128xf32>
    %217 = arith.divf %215, %216 : vector<8x128xf32>
    %218 = vector.extract_strided_slice %210 {offsets = [0, 128], sizes = [8, 128], strides = [1, 1]} : vector<8x384xf32> to vector<8x128xf32>
    %219 = arith.addf %8, %218 : vector<8x128xf32>
    %220 = arith.negf %219 : vector<8x128xf32>
    %221 = math.exp %220 : vector<8x128xf32>
    %cst_55 = arith.constant 1.000000e+00 : f32
    %222 = vector.broadcast %cst_55 : f32 to vector<8x128xf32>
    %223 = arith.addf %222, %221 : vector<8x128xf32>
    %224 = arith.divf %222, %223 : vector<8x128xf32>
    %225 = vector.extract_strided_slice %210 {offsets = [0, 256], sizes = [8, 128], strides = [1, 1]} : vector<8x384xf32> to vector<8x128xf32>
    %226 = arith.addf %225, %12 : vector<8x128xf32>
    %227 = arith.mulf %217, %226 : vector<8x128xf32>
    %228 = arith.addf %9, %227 : vector<8x128xf32>
    %229 = math.tanh %228 : vector<8x128xf32>
    %cst_56 = arith.constant 1.000000e+00 : f32
    %230 = vector.broadcast %cst_56 : f32 to vector<8x128xf32>
    %231 = arith.subf %230, %224 : vector<8x128xf32>
    %232 = arith.mulf %231, %229 : vector<8x128xf32>
    %233 = arith.mulf %224, %206 : vector<8x128xf32>
    %234 = arith.addf %232, %233 : vector<8x128xf32>
    %c7 = arith.constant 7 : index
    %c0_57 = arith.constant 0 : index
    %c0_58 = arith.constant 0 : index
    %235 = vector.load %arg8[%c7, %c0_57, %c0_58] : memref<10x8x128xf32, #tpu.memory_space<vmem>>, vector<1x8x128xf32>
    %236 = vector.shape_cast %235 : vector<1x8x128xf32> to vector<8x128xf32>
    %237 = vector.shape_cast %234 : vector<8x128xf32> to vector<1x8x128xf32>
    tpu.vector_store %arg8[%c7, %c0_57, %c0_58], %237 {strides = array<i32>} : memref<10x8x128xf32, #tpu.memory_space<vmem>>, vector<1x8x128xf32>,
    %cst_59 = arith.constant dense<0.000000e+00> : vector<8x384xf32>
    %238 = tpu.matmul %234, %2, %cst_59 {dimension_numbers = #tpu.dot_dimension_numbers<[1], [0], [0], [1], [0, 0, 1, 1], [], []>} : vector<8x128xf32>, vector<128x384xf32>, vector<8x384xf32> -> vector<8x384xf32>
    %239 = vector.extract_strided_slice %238 {offsets = [0, 0], sizes = [8, 128], strides = [1, 1]} : vector<8x384xf32> to vector<8x128xf32>
    %240 = arith.addf %7, %239 : vector<8x128xf32>
    %241 = arith.negf %240 : vector<8x128xf32>
    %242 = math.exp %241 : vector<8x128xf32>
    %cst_60 = arith.constant 1.000000e+00 : f32
    %243 = vector.broadcast %cst_60 : f32 to vector<8x128xf32>
    %244 = arith.addf %243, %242 : vector<8x128xf32>
    %245 = arith.divf %243, %244 : vector<8x128xf32>
    %246 = vector.extract_strided_slice %238 {offsets = [0, 128], sizes = [8, 128], strides = [1, 1]} : vector<8x384xf32> to vector<8x128xf32>
    %247 = arith.addf %8, %246 : vector<8x128xf32>
    %248 = arith.negf %247 : vector<8x128xf32>
    %249 = math.exp %248 : vector<8x128xf32>
    %cst_61 = arith.constant 1.000000e+00 : f32
    %250 = vector.broadcast %cst_61 : f32 to vector<8x128xf32>
    %251 = arith.addf %250, %249 : vector<8x128xf32>
    %252 = arith.divf %250, %251 : vector<8x128xf32>
    %253 = vector.extract_strided_slice %238 {offsets = [0, 256], sizes = [8, 128], strides = [1, 1]} : vector<8x384xf32> to vector<8x128xf32>
    %254 = arith.addf %253, %12 : vector<8x128xf32>
    %255 = arith.mulf %245, %254 : vector<8x128xf32>
    %256 = arith.addf %9, %255 : vector<8x128xf32>
    %257 = math.tanh %256 : vector<8x128xf32>
    %cst_62 = arith.constant 1.000000e+00 : f32
    %258 = vector.broadcast %cst_62 : f32 to vector<8x128xf32>
    %259 = arith.subf %258, %252 : vector<8x128xf32>
    %260 = arith.mulf %259, %257 : vector<8x128xf32>
    %261 = arith.mulf %252, %234 : vector<8x128xf32>
    %262 = arith.addf %260, %261 : vector<8x128xf32>
    %c8 = arith.constant 8 : index
    %c0_63 = arith.constant 0 : index
    %c0_64 = arith.constant 0 : index
    %263 = vector.load %arg8[%c8, %c0_63, %c0_64] : memref<10x8x128xf32, #tpu.memory_space<vmem>>, vector<1x8x128xf32>
    %264 = vector.shape_cast %263 : vector<1x8x128xf32> to vector<8x128xf32>
    %265 = vector.shape_cast %262 : vector<8x128xf32> to vector<1x8x128xf32>
    tpu.vector_store %arg8[%c8, %c0_63, %c0_64], %265 {strides = array<i32>} : memref<10x8x128xf32, #tpu.memory_space<vmem>>, vector<1x8x128xf32>,
    %cst_65 = arith.constant dense<0.000000e+00> : vector<8x384xf32>
    %266 = tpu.matmul %262, %2, %cst_65 {dimension_numbers = #tpu.dot_dimension_numbers<[1], [0], [0], [1], [0, 0, 1, 1], [], []>} : vector<8x128xf32>, vector<128x384xf32>, vector<8x384xf32> -> vector<8x384xf32>
    %267 = vector.extract_strided_slice %266 {offsets = [0, 0], sizes = [8, 128], strides = [1, 1]} : vector<8x384xf32> to vector<8x128xf32>
    %268 = arith.addf %7, %267 : vector<8x128xf32>
    %269 = arith.negf %268 : vector<8x128xf32>
    %270 = math.exp %269 : vector<8x128xf32>
    %cst_66 = arith.constant 1.000000e+00 : f32
    %271 = vector.broadcast %cst_66 : f32 to vector<8x128xf32>
    %272 = arith.addf %271, %270 : vector<8x128xf32>
    %273 = arith.divf %271, %272 : vector<8x128xf32>
    %274 = vector.extract_strided_slice %266 {offsets = [0, 128], sizes = [8, 128], strides = [1, 1]} : vector<8x384xf32> to vector<8x128xf32>
    %275 = arith.addf %8, %274 : vector<8x128xf32>
    %276 = arith.negf %275 : vector<8x128xf32>
    %277 = math.exp %276 : vector<8x128xf32>
    %cst_67 = arith.constant 1.000000e+00 : f32
    %278 = vector.broadcast %cst_67 : f32 to vector<8x128xf32>
    %279 = arith.addf %278, %277 : vector<8x128xf32>
    %280 = arith.divf %278, %279 : vector<8x128xf32>
    %281 = vector.extract_strided_slice %266 {offsets = [0, 256], sizes = [8, 128], strides = [1, 1]} : vector<8x384xf32> to vector<8x128xf32>
    %282 = arith.addf %281, %12 : vector<8x128xf32>
    %283 = arith.mulf %273, %282 : vector<8x128xf32>
    %284 = arith.addf %9, %283 : vector<8x128xf32>
    %285 = math.tanh %284 : vector<8x128xf32>
    %cst_68 = arith.constant 1.000000e+00 : f32
    %286 = vector.broadcast %cst_68 : f32 to vector<8x128xf32>
    %287 = arith.subf %286, %280 : vector<8x128xf32>
    %288 = arith.mulf %287, %285 : vector<8x128xf32>
    %289 = arith.mulf %280, %262 : vector<8x128xf32>
    %290 = arith.addf %288, %289 : vector<8x128xf32>
    %c9 = arith.constant 9 : index
    %c0_69 = arith.constant 0 : index
    %c0_70 = arith.constant 0 : index
    %291 = vector.load %arg8[%c9, %c0_69, %c0_70] : memref<10x8x128xf32, #tpu.memory_space<vmem>>, vector<1x8x128xf32>
    %292 = vector.shape_cast %291 : vector<1x8x128xf32> to vector<8x128xf32>
    %293 = vector.shape_cast %290 : vector<8x128xf32> to vector<1x8x128xf32>
    tpu.vector_store %arg8[%c9, %c0_69, %c0_70], %293 {strides = array<i32>} : memref<10x8x128xf32, #tpu.memory_space<vmem>>, vector<1x8x128xf32>,
    %c0_71 = arith.constant 0 : index
    %c0_72 = arith.constant 0 : index
    %c0_73 = arith.constant 0 : index
    %294 = vector.load %arg8[%c0_71, %c0_72, %c0_73] : memref<10x8x128xf32, #tpu.memory_space<vmem>>, vector<10x8x128xf32>
    %295 = vector.shape_cast %294 : vector<10x8x128xf32> to vector<80x128xf32>
    %c0_74 = arith.constant 0 : index
    %c0_75 = arith.constant 0 : index
    %296 = vector.load %arg5[%c0_74, %c0_75] : memref<128x128xf32, #tpu.memory_space<vmem>>, vector<128x128xf32>
    %cst_76 = arith.constant dense<0.000000e+00> : vector<80x128xf32>
    %297 = tpu.matmul %295, %296, %cst_76 {dimension_numbers = #tpu.dot_dimension_numbers<[1], [0], [0], [1], [0, 0, 1, 1], [], []>} : vector<80x128xf32>, vector<128x128xf32>, vector<80x128xf32> -> vector<80x128xf32>
    %c0_77 = arith.constant 0 : index
    %c0_78 = arith.constant 0 : index
    %298 = vector.load %arg6[%c0_77, %c0_78] : memref<1x128xf32, #tpu.memory_space<vmem>>, vector<1x128xf32>
    %299 = vector.broadcast %298 : vector<1x128xf32> to vector<80x128xf32>
    %300 = arith.addf %297, %299 : vector<80x128xf32>
    %cst_79 = arith.constant dense<0xFF800000> : vector<80xf32>
    %301 = vector.multi_reduction <maximumf>, %300, %cst_79 [1] : vector<80x128xf32> to vector<80xf32>
    %302 = vector.shape_cast %301 : vector<80xf32> to vector<80x1xf32>
    %303 = vector.broadcast %302 : vector<80x1xf32> to vector<80x128xf32>
    %304 = arith.subf %300, %303 : vector<80x128xf32>
    %305 = math.exp %304 : vector<80x128xf32>
    %cst_80 = arith.constant dense<0.000000e+00> : vector<80xf32>
    %306 = vector.multi_reduction <add>, %305, %cst_80 [1] : vector<80x128xf32> to vector<80xf32>
    %307 = vector.shape_cast %306 : vector<80xf32> to vector<80x1xf32>
    %308 = math.log %307 : vector<80x1xf32>
    %309 = arith.addf %308, %302 : vector<80x1xf32>
    %310 = vector.broadcast %309 : vector<80x1xf32> to vector<80x128xf32>
    %311 = arith.subf %300, %310 : vector<80x128xf32>
    %c0_81 = arith.constant 0 : index
    %c0_82 = arith.constant 0 : index
    %312 = vector.load %arg7[%c0_81, %c0_82] : memref<80x128xf32, #tpu.memory_space<vmem>>, vector<80x128xf32>
    tpu.vector_store %arg7[%c0_81, %c0_82], %311 {strides = array<i32>} : memref<80x128xf32, #tpu.memory_space<vmem>>, vector<80x128xf32>,
    return
  }
}

</mosaic_0001>

<llo_original>
// kernel: tpu_custom_call.1
$region0: #{tpu_custom_call.1}
  #allocation0 [shape = 'u32[]', space=smem, size = 0x4, offset = 0x4, fixed_abs, tag = 'smem constant byte address 0x4 - core index']
  #allocation1 [shape = 'u32[144,128]{1,0:T(1,128)}', space=vmem, size = 0x12000, scoped, tag = 'internal scratch']
  #allocation2 [shape = 'f32[10,8,128]{2,1,0:T(8,128)}', space=vmem, size = 0xa000, scoped, tag = 'scratch operand']
  %s0 = inlined_call_operand.hbm [shape: f32[8,16], index: 0, kind: input, shape index: {}]
  %s1 = inlined_call_operand.hbm [shape: f32[16,384], index: 1, kind: input, shape index: {}]
  %s2 = inlined_call_operand.hbm [shape: f32[128,384], index: 2, kind: input, shape index: {}]
  %s3 = inlined_call_operand.vmem [shape: f32[1,384], index: 3, kind: input, shape index: {}]
  %s4 = inlined_call_operand.vmem [shape: f32[1,128], index: 4, kind: input, shape index: {}]
  %s5 = inlined_call_operand.hbm [shape: f32[128,128], index: 5, kind: input, shape index: {}]
  %s6 = inlined_call_operand.vmem [shape: f32[1,128], index: 6, kind: input, shape index: {}]
  %s7 = inlined_call_operand.hbm [shape: f32[80,128], index: 7, kind: output, shape index: {}]
  %s8 = sld [smem:[#allocation0]]
  $region54: #{tpu_custom_call.1} parent=0
    _
  %s10 = ssub.s32 1, %s8
  %s11 = scalar_select 0, %s10, %s8
  $region1: #{tpu_custom_call.1} parent=0
    #allocation3 [shape = 'u8[4096]{0}', space=vmem, size = 0x1000, scoped, tag = 'input window, operand 0, single buffered']
    #allocation4 [shape = 's32[1]{0}', space=sflag, size = 0x4, scoped, tag = 'scoped memory for tpu_custom_call.1']
    #allocation5 [shape = 's32[1]{0}', space=sflag, size = 0x4, scoped, tag = 'scoped memory for tpu_custom_call.1']
    #allocation6 [shape = 'u8[24576]{0}', space=vmem, size = 0x6000, scoped, tag = 'input window, operand 1, single buffered']
    #allocation7 [shape = 's32[1]{0}', space=sflag, size = 0x4, scoped, tag = 'scoped memory for tpu_custom_call.1']
    #allocation8 [shape = 'u8[196608]{0}', space=vmem, size = 0x30000, scoped, tag = 'input window, operand 2, single buffered']
    #allocation9 [shape = 'u8[65536]{0}', space=vmem, size = 0x10000, scoped, tag = 'input window, operand 5, single buffered']
    #allocation10 [shape = 's32[1]{0}', space=sflag, size = 0x4, scoped, tag = 'scoped memory for tpu_custom_call.1']
    #allocation11 [shape = 'u8[40960]{0}', space=vmem, size = 0xa000, scoped, tag = 'output window, operand 0, single buffered']
    %12 = vsyncpa [#allocation4], 0
    %13 = vsyncpa [#allocation7], 0
    %14 = vsyncpa [#allocation10], 0
    %15 = vsyncpa [#allocation5], 0
    // Predicated region
    $region2: #{tpu_custom_call.1} parent=1 // pred_check
      _
    $region3: #{tpu_custom_call.1} parent=1 // pred_check_branch
      %17 = sbr.rel (0) target = $region5
    $region4: #{tpu_custom_call.1} parent=1 // pred_region
      %s19 = ssub.s32 128, 128
      %20 = vsyncadd [#allocation4], %s19
      %s22 = sshll.u32 [#allocation3], 4
      %s23 = int_to_ptr.vmem [resolvable:$true] %s22
      %25 = dma.hbm_to_vmem [thread:$0]  %s0, 128, %s23, [#allocation4]
    $region5: #{tpu_custom_call.1} parent=1 // pred_fallthru
      _
    // Predicated region
    $region6: #{tpu_custom_call.1} parent=1 // pred_check
      _
    $region7: #{tpu_custom_call.1} parent=1 // pred_check_branch
      %27 = sbr.rel (0) target = $region9
    $region8: #{tpu_custom_call.1} parent=1 // pred_region
      %s29 = ssub.s32 768, 768
      %30 = vsyncadd [#allocation7], %s29
      %s31 = sshll.u32 [#allocation6], 4
      %s32 = int_to_ptr.vmem [resolvable:$true] %s31
      %37 = dma.hbm_to_vmem [thread:$0]  %s1, 768, %s32, [#allocation7], 384, 384, 24
    $region9: #{tpu_custom_call.1} parent=1 // pred_fallthru
      _
    // Predicated region
    $region10: #{tpu_custom_call.1} parent=1 // pred_check
      _
    $region11: #{tpu_custom_call.1} parent=1 // pred_check_branch
      %39 = sbr.rel (0) target = $region13
    $region12: #{tpu_custom_call.1} parent=1 // pred_region
      %s41 = ssub.s32 6144, 6144
      %42 = vsyncadd [#allocation7], %s41
      %s43 = sshll.u32 [#allocation8], 4
      %s44 = int_to_ptr.vmem [resolvable:$true] %s43
      %49 = dma.hbm_to_vmem [thread:$0]  %s2, 6144, %s44, [#allocation7], 384, 384, 24
    $region13: #{tpu_custom_call.1} parent=1 // pred_fallthru
      _
    // Predicated region
    $region14: #{tpu_custom_call.1} parent=1 // pred_check
      _
    $region15: #{tpu_custom_call.1} parent=1 // pred_check_branch
      %51 = sbr.rel (0) target = $region17
    $region16: #{tpu_custom_call.1} parent=1 // pred_region
      _
    $region17: #{tpu_custom_call.1} parent=1 // pred_fallthru
      _
    // Predicated region
    $region18: #{tpu_custom_call.1} parent=1 // pred_check
      _
    $region19: #{tpu_custom_call.1} parent=1 // pred_check_branch
      %53 = sbr.rel (0) target = $region21
    $region20: #{tpu_custom_call.1} parent=1 // pred_region
      _
    $region21: #{tpu_custom_call.1} parent=1 // pred_fallthru
      _
    // Predicated region
    $region22: #{tpu_custom_call.1} parent=1 // pred_check
      _
    $region23: #{tpu_custom_call.1} parent=1 // pred_check_branch
      %55 = sbr.rel (0) target = $region25
    $region24: #{tpu_custom_call.1} parent=1 // pred_region
      %s57 = ssub.s32 2048, 2048
      %58 = vsyncadd [#allocation10], %s57
      %s59 = sshll.u32 [#allocation9], 4
      %s60 = int_to_ptr.vmem [resolvable:$true] %s59
      %65 = dma.hbm_to_vmem [thread:$0]  %s5, 2048, %s60, [#allocation10], 128, 128, 8
    $region25: #{tpu_custom_call.1} parent=1 // pred_fallthru
      _
    // Predicated region
    $region26: #{tpu_custom_call.1} parent=1 // pred_check
      _
    $region27: #{tpu_custom_call.1} parent=1 // pred_check_branch
      %67 = sbr.rel (0) target = $region29
    $region28: #{tpu_custom_call.1} parent=1 // pred_region
      _
    $region29: #{tpu_custom_call.1} parent=1 // pred_fallthru
      _
    // Predicated region
    $region30: #{tpu_custom_call.1} parent=1 // pred_check
      _
    $region31: #{tpu_custom_call.1} parent=1 // pred_check_branch
      %69 = sbr.rel (0) target = $region33
    $region32: #{tpu_custom_call.1} parent=1 // pred_region
      %70 = dma.done [#allocation4], 128
    $region33: #{tpu_custom_call.1} parent=1 // pred_fallthru
      _
    // Predicated region
    $region34: #{tpu_custom_call.1} parent=1 // pred_check
      _
    $region35: #{tpu_custom_call.1} parent=1 // pred_check_branch
      %72 = sbr.rel (0) target = $region37
    $region36: #{tpu_custom_call.1} parent=1 // pred_region
      %73 = dma.done [#allocation7], 768
    $region37: #{tpu_custom_call.1} parent=1 // pred_fallthru
      _
    // Predicated region
    $region38: #{tpu_custom_call.1} parent=1 // pred_check
      _
    $region39: #{tpu_custom_call.1} parent=1 // pred_check_branch
      %75 = sbr.rel (0) target = $region41
    $region40: #{tpu_custom_call.1} parent=1 // pred_region
      %76 = dma.done [#allocation7], 6144
    $region41: #{tpu_custom_call.1} parent=1 // pred_fallthru
      _
    // Predicated region
    $region42: #{tpu_custom_call.1} parent=1 // pred_check
      _
    $region43: #{tpu_custom_call.1} parent=1 // pred_check_branch
      %78 = sbr.rel (0) target = $region45
    $region44: #{tpu_custom_call.1} parent=1 // pred_region
      %79 = dma.done [#allocation10], 2048
    $region45: #{tpu_custom_call.1} parent=1 // pred_fallthru
      _
    %v80 = vld [vmem:[#allocation3] sm:$0xff]
    %v81 = vld [vmem:[#allocation6] sm:$0xff]
    %v82 = vld [vmem:[#allocation6 + $0x8] sm:$0xff]
    %v83 = vld [vmem:[#allocation6 + $0x10] sm:$0xff]
    %v84 = vld [vmem:[#allocation6 + $0x18] sm:$0xff]
    %v85 = vld [vmem:[#allocation6 + $0x20] sm:$0xff]
    %v86 = vld [vmem:[#allocation6 + $0x28] sm:$0xff]
    %v87 = vld [vmem:[#allocation8] sm:$0xff]
    %v88 = vld [vmem:[#allocation8 + $0x8] sm:$0xff]
    %v89 = vld [vmem:[#allocation8 + $0x10] sm:$0xff]
    %v90 = vld [vmem:[#allocation8 + $0x18] sm:$0xff]
    %v91 = vld [vmem:[#allocation8 + $0x20] sm:$0xff]
    %v92 = vld [vmem:[#allocation8 + $0x28] sm:$0xff]
    %v93 = vld [vmem:[#allocation8 + $0x30] sm:$0xff]
    %v94 = vld [vmem:[#allocation8 + $0x38] sm:$0xff]
    %v95 = vld [vmem:[#allocation8 + $0x40] sm:$0xff]
    %v96 = vld [vmem:[#allocation8 + $0x48] sm:$0xff]
    %v97 = vld [vmem:[#allocation8 + $0x50] sm:$0xff]
    %v98 = vld [vmem:[#allocation8 + $0x58] sm:$0xff]
    %v99 = vld [vmem:[#allocation8 + $0x60] sm:$0xff]
    %v100 = vld [vmem:[#allocation8 + $0x68] sm:$0xff]
    %v101 = vld [vmem:[#allocation8 + $0x70] sm:$0xff]
    %v102 = vld [vmem:[#allocation8 + $0x78] sm:$0xff]
    %v103 = vld [vmem:[#allocation8 + $0x80] sm:$0xff]
    %v104 = vld [vmem:[#allocation8 + $0x88] sm:$0xff]
    %v105 = vld [vmem:[#allocation8 + $0x90] sm:$0xff]
    %v106 = vld [vmem:[#allocation8 + $0x98] sm:$0xff]
    %v107 = vld [vmem:[#allocation8 + $0xa0] sm:$0xff]
    %v108 = vld [vmem:[#allocation8 + $0xa8] sm:$0xff]
    %v109 = vld [vmem:[#allocation8 + $0xb0] sm:$0xff]
    %v110 = vld [vmem:[#allocation8 + $0xb8] sm:$0xff]
    %v111 = vld [vmem:[#allocation8 + $0xc0] sm:$0xff]
    %v112 = vld [vmem:[#allocation8 + $0xc8] sm:$0xff]
    %v113 = vld [vmem:[#allocation8 + $0xd0] sm:$0xff]
    %v114 = vld [vmem:[#allocation8 + $0xd8] sm:$0xff]
    %v115 = vld [vmem:[#allocation8 + $0xe0] sm:$0xff]
    %v116 = vld [vmem:[#allocation8 + $0xe8] sm:$0xff]
    %v117 = vld [vmem:[#allocation8 + $0xf0] sm:$0xff]
    %v118 = vld [vmem:[#allocation8 + $0xf8] sm:$0xff]
    %v119 = vld [vmem:[#allocation8 + $0x100] sm:$0xff]
    %v120 = vld [vmem:[#allocation8 + $0x108] sm:$0xff]
    %v121 = vld [vmem:[#allocation8 + $0x110] sm:$0xff]
    %v122 = vld [vmem:[#allocation8 + $0x118] sm:$0xff]
    %v123 = vld [vmem:[#allocation8 + $0x120] sm:$0xff]
    %v124 = vld [vmem:[#allocation8 + $0x128] sm:$0xff]
    %v125 = vld [vmem:[#allocation8 + $0x130] sm:$0xff]
    %v126 = vld [vmem:[#allocation8 + $0x138] sm:$0xff]
    %v127 = vld [vmem:[#allocation8 + $0x140] sm:$0xff]
    %v128 = vld [vmem:[#allocation8 + $0x148] sm:$0xff]
    %v129 = vld [vmem:[#allocation8 + $0x150] sm:$0xff]
    %v130 = vld [vmem:[#allocation8 + $0x158] sm:$0xff]
    %v131 = vld [vmem:[#allocation8 + $0x160] sm:$0xff]
    %v132 = vld [vmem:[#allocation8 + $0x168] sm:$0xff]
    %v133 = vld [vmem:[#allocation8 + $0x170] sm:$0xff]
    %v134 = vld [vmem:[#allocation8 + $0x178] sm:$0xff]
    %v135 = vld [vmem:[%s3] sm:$0x7]
    %v137 = vlaneseq
    %v138 = vshrl.u32 %v137, 7
    %v139 = vsub.s32 0, %v138
    %v140 = vrot.slane %v135, %v139
    %v141 = vlaneseq
    %v142 = vshrl.u32 %v141, 7
    %v143 = vsub.s32 1, %v142
    %v144 = vrot.slane %v135, %v143
    %v145 = vlaneseq
    %v146 = vshrl.u32 %v145, 7
    %v147 = vsub.s32 2, %v146
    %v148 = vrot.slane %v135, %v147
    %vm152 = vcmask 130048
    %v154 = vsel %vm152, %v80, 0
    %156 = vmatprep.subr.mxu0 %v82
    %157 = vmatpush1.msra.mxu0 %v81
    %158 = vmatprep.subr.mxu0 %v85
    %159 = vmatpush1.msra.mxu0 %v84
    %160 = vmatprep.subr.mxu0 0.0
    %161 = vmatpush1.msra.mxu0 0.0
    %162 = vmatprep.subr.mxu0 0.0
    %163 = vmatpush1.msra.mxu0 0.0
    %164 = vmatprep.subr.mxu0 0.0
    %165 = vmatpush1.msra.mxu0 0.0
    %166 = vmatprep.subr.mxu0 0.0
    %167 = vmatpush1.msra.mxu0 0.0
    %168 = vmatprep.subr.mxu0 0.0
    %169 = vmatpush1.msra.mxu0 0.0
    %170 = vmatprep.subr.mxu0 0.0
    %171 = vmatpush1.msra.mxu0 0.0
    %172 = vmatprep.subr.mxu0 0.0
    %173 = vmatpush1.msra.mxu0 0.0
    %174 = vmatprep.subr.mxu0 0.0
    %175 = vmatpush1.msra.mxu0 0.0
    %176 = vmatprep.subr.mxu0 0.0
    %177 = vmatpush1.msra.mxu0 0.0
    %178 = vmatprep.subr.mxu0 0.0
    %179 = vmatpush1.msra.mxu0 0.0
    %180 = vmatprep.subr.mxu0 0.0
    %181 = vmatpush1.msra.mxu0 0.0
    %182 = vmatprep.subr.mxu0 0.0
    %183 = vmatpush1.msra.mxu0 0.0
    %184 = vmatprep.subr.mxu0 0.0
    %185 = vmatpush1.msra.mxu0 0.0
    %186 = vmatprep.subr.mxu0 0.0
    %187 = vmatpush1.msra.mxu0 0.0
    %188 = vmatprep.subr.mxu0 0.0
    %189 = vmatpush1.msra.mxu0 0.0
    %190 = vmatprep.subr.mxu0 0.0
    %191 = vmatpush1.msra.mxu0 0.0
    %192 = vmatprep.subr.mxu0 0.0
    %193 = vmatpush1.msra.mxu0 0.0
    %194 = vmatprep.subr.mxu0 0.0
    %195 = vmatpush1.msra.mxu0 0.0
    %196 = vmatprep.subr.mxu0 0.0
    %197 = vmatpush1.msra.mxu0 0.0
    %198 = vmatprep.subr.mxu0 0.0
    %199 = vmatpush1.msra.mxu0 0.0
    %200 = vmatprep.subr.mxu0 0.0
    %201 = vmatpush1.msra.mxu0 0.0
    %202 = vmatprep.subr.mxu0 0.0
    %203 = vmatpush1.msra.mxu0 0.0
    %204 = vmatprep.subr.mxu0 0.0
    %205 = vmatpush1.msra.mxu0 0.0
    %206 = vmatprep.subr.mxu0 0.0
    %207 = vmatpush1.msra.mxu0 0.0
    %208 = vmatprep.subr.mxu0 0.0
    %209 = vmatpush1.msra.mxu0 0.0
    %210 = vmatprep.subr.mxu0 0.0
    %211 = vmatpush1.msra.mxu0 0.0
    %212 = vmatprep.subr.mxu0 0.0
    %213 = vmatpush1.msra.mxu0 0.0
    %214 = vmatprep.subr.mxu0 0.0
    %215 = vmatpush1.msra.mxu0 0.0
    %216 = vmatprep.subr.mxu0 0.0
    %217 = vmatpush1.msra.mxu0 0.0
    %218 = vmatprep.subr.mxu0 0.0
    %219 = vmatpush1.msra.mxu0 0.0
    %220 = vmatprep.mubr.f32.mxu0 0.0
    %221 = vmatmul.mubr.f32.gmra.mrb[0].mxu0 %v154
    %v222 = vpop.f32.mrb[0].mxu0
    %v223 = vadd.f32 %v140, %v222
    %v224 = vpop.f32.mrb[0].mxu0
    %v225 = vadd.f32 %v144, %v224
    %226 = vdwg.mxu0
    %227 = vmatprep.subr.mxu0 0.0
    %228 = vmatpush1.msra.mxu0 %v83
    %229 = vmatprep.subr.mxu0 0.0
    %230 = vmatpush1.msra.mxu0 %v86
    %231 = vmatprep.subr.mxu0 0.0
    %232 = vmatpush1.msra.mxu0 0.0
    %233 = vmatprep.subr.mxu0 0.0
    %234 = vmatpush1.msra.mxu0 0.0
    %235 = vmatprep.subr.mxu0 0.0
    %236 = vmatpush1.msra.mxu0 0.0
    %237 = vmatprep.subr.mxu0 0.0
    %238 = vmatpush1.msra.mxu0 0.0
    %239 = vmatprep.subr.mxu0 0.0
    %240 = vmatpush1.msra.mxu0 0.0
    %241 = vmatprep.subr.mxu0 0.0
    %242 = vmatpush1.msra.mxu0 0.0
    %243 = vmatprep.subr.mxu0 0.0
    %244 = vmatpush1.msra.mxu0 0.0
    %245 = vmatprep.subr.mxu0 0.0
    %246 = vmatpush1.msra.mxu0 0.0
    %247 = vmatprep.subr.mxu0 0.0
    %248 = vmatpush1.msra.mxu0 0.0
    %249 = vmatprep.subr.mxu0 0.0
    %250 = vmatpush1.msra.mxu0 0.0
    %251 = vmatprep.subr.mxu0 0.0
    %252 = vmatpush1.msra.mxu0 0.0
    %253 = vmatprep.subr.mxu0 0.0
    %254 = vmatpush1.msra.mxu0 0.0
    %255 = vmatprep.subr.mxu0 0.0
    %256 = vmatpush1.msra.mxu0 0.0
    %257 = vmatprep.subr.mxu0 0.0
    %258 = vmatpush1.msra.mxu0 0.0
    %259 = vmatprep.subr.mxu0 0.0
    %260 = vmatpush1.msra.mxu0 0.0
    %261 = vmatprep.subr.mxu0 0.0
    %262 = vmatpush1.msra.mxu0 0.0
    %263 = vmatprep.subr.mxu0 0.0
    %264 = vmatpush1.msra.mxu0 0.0
    %265 = vmatprep.subr.mxu0 0.0
    %266 = vmatpush1.msra.mxu0 0.0
    %267 = vmatprep.subr.mxu0 0.0
    %268 = vmatpush1.msra.mxu0 0.0
    %269 = vmatprep.subr.mxu0 0.0
    %270 = vmatpush1.msra.mxu0 0.0
    %271 = vmatprep.subr.mxu0 0.0
    %272 = vmatpush1.msra.mxu0 0.0
    %273 = vmatprep.subr.mxu0 0.0
    %274 = vmatpush1.msra.mxu0 0.0
    %275 = vmatprep.subr.mxu0 0.0
    %276 = vmatpush1.msra.mxu0 0.0
    %277 = vmatprep.subr.mxu0 0.0
    %278 = vmatpush1.msra.mxu0 0.0
    %279 = vmatprep.subr.mxu0 0.0
    %280 = vmatpush1.msra.mxu0 0.0
    %281 = vmatprep.subr.mxu0 0.0
    %282 = vmatpush1.msra.mxu0 0.0
    %283 = vmatprep.subr.mxu0 0.0
    %284 = vmatpush1.msra.mxu0 0.0
    %285 = vmatprep.subr.mxu0 0.0
    %286 = vmatpush1.msra.mxu0 0.0
    %287 = vmatprep.subr.mxu0 0.0
    %288 = vmatpush1.msra.mxu0 0.0
    %289 = vmatprep.subr.mxu0 0.0
    %290 = vmatpush1.msra.mxu0 0.0
    %291 = vmatprep.mubr.f32.mxu0 0.0
    %292 = vmatmul.mubr.f32.gmra.mrb[0].mxu0 %v154
    %v293 = vpop.f32.mrb[0].mxu0
    %v294 = vadd.f32 %v148, %v293
    %v295 = vpop.f32.mrb[0].mxu0
    %296 = vdwg.mxu0
    %v297 = vld [vmem:[%s4] sm:$0x1]
    %v299 = vlaneseq
    %v300 = vshrl.u32 %v299, 7
    %v301 = vsub.s32 0, %v300
    %v302 = vrot.slane %v297, %v301
    %304 = vmatprep.subr.mxu0 %v88
    %305 = vmatpush1.msra.mxu0 %v87
    %306 = vmatprep.subr.mxu0 %v91
    %307 = vmatpush1.msra.mxu0 %v90
    %308 = vmatprep.subr.mxu0 %v94
    %309 = vmatpush1.msra.mxu0 %v93
    %310 = vmatprep.subr.mxu0 %v97
    %311 = vmatpush1.msra.mxu0 %v96
    %312 = vmatprep.subr.mxu0 %v100
    %313 = vmatpush1.msra.mxu0 %v99
    %314 = vmatprep.subr.mxu0 %v103
    %315 = vmatpush1.msra.mxu0 %v102
    %316 = vmatprep.subr.mxu0 %v106
    %317 = vmatpush1.msra.mxu0 %v105
    %318 = vmatprep.subr.mxu0 %v109
    %319 = vmatpush1.msra.mxu0 %v108
    %320 = vmatprep.subr.mxu0 %v112
    %321 = vmatpush1.msra.mxu0 %v111
    %322 = vmatprep.subr.mxu0 %v115
    %323 = vmatpush1.msra.mxu0 %v114
    %324 = vmatprep.subr.mxu0 %v118
    %325 = vmatpush1.msra.mxu0 %v117
    %326 = vmatprep.subr.mxu0 %v121
    %327 = vmatpush1.msra.mxu0 %v120
    %328 = vmatprep.subr.mxu0 %v124
    %329 = vmatpush1.msra.mxu0 %v123
    %330 = vmatprep.subr.mxu0 %v127
    %331 = vmatpush1.msra.mxu0 %v126
    %332 = vmatprep.subr.mxu0 %v130
    %333 = vmatpush1.msra.mxu0 %v129
    %334 = vmatprep.subr.mxu0 %v133
    %335 = vmatpush1.msra.mxu0 %v132
    %336 = vmatprep.subr.mxu0 0.0
    %337 = vmatpush1.msra.mxu0 0.0
    %338 = vmatprep.subr.mxu0 0.0
    %339 = vmatpush1.msra.mxu0 0.0
    %340 = vmatprep.subr.mxu0 0.0
    %341 = vmatpush1.msra.mxu0 0.0
    %342 = vmatprep.subr.mxu0 0.0
    %343 = vmatpush1.msra.mxu0 0.0
    %344 = vmatprep.subr.mxu0 0.0
    %345 = vmatpush1.msra.mxu0 0.0
    %346 = vmatprep.subr.mxu0 0.0
    %347 = vmatpush1.msra.mxu0 0.0
    %348 = vmatprep.subr.mxu0 0.0
    %349 = vmatpush1.msra.mxu0 0.0
    %350 = vmatprep.subr.mxu0 0.0
    %351 = vmatpush1.msra.mxu0 0.0
    %352 = vmatprep.subr.mxu0 0.0
    %353 = vmatpush1.msra.mxu0 0.0
    %354 = vmatprep.subr.mxu0 0.0
    %355 = vmatpush1.msra.mxu0 0.0
    %356 = vmatprep.subr.mxu0 0.0
    %357 = vmatpush1.msra.mxu0 0.0
    %358 = vmatprep.subr.mxu0 0.0
    %359 = vmatpush1.msra.mxu0 0.0
    %360 = vmatprep.subr.mxu0 0.0
    %361 = vmatpush1.msra.mxu0 0.0
    %362 = vmatprep.subr.mxu0 0.0
    %363 = vmatpush1.msra.mxu0 0.0
    %364 = vmatprep.subr.mxu0 0.0
    %365 = vmatpush1.msra.mxu0 0.0
    %366 = vmatprep.subr.mxu0 0.0
    %367 = vmatpush1.msra.mxu0 0.0
    %368 = vmatprep.mubr.f32.mxu0 0.0
    %369 = vmatmul.mubr.f32.gmra.mrb[0].mxu0 0.0
    %v370 = vpop.f32.mrb[0].mxu0
    %v371 = vadd.f32 0.0, %v370
    %v372 = vpop.f32.mrb[0].mxu0
    %v373 = vadd.f32 0.0, %v372
    %374 = vdwg.mxu0
    %375 = vmatprep.subr.mxu0 0.0
    %376 = vmatpush1.msra.mxu0 %v89
    %377 = vmatprep.subr.mxu0 0.0
    %378 = vmatpush1.msra.mxu0 %v92
    %379 = vmatprep.subr.mxu0 0.0
    %380 = vmatpush1.msra.mxu0 %v95
    %381 = vmatprep.subr.mxu0 0.0
    %382 = vmatpush1.msra.mxu0 %v98
    %383 = vmatprep.subr.mxu0 0.0
    %384 = vmatpush1.msra.mxu0 %v101
    %385 = vmatprep.subr.mxu0 0.0
    %386 = vmatpush1.msra.mxu0 %v104
    %387 = vmatprep.subr.mxu0 0.0
    %388 = vmatpush1.msra.mxu0 %v107
    %389 = vmatprep.subr.mxu0 0.0
    %390 = vmatpush1.msra.mxu0 %v110
    %391 = vmatprep.subr.mxu0 0.0
    %392 = vmatpush1.msra.mxu0 %v113
    %393 = vmatprep.subr.mxu0 0.0
    %394 = vmatpush1.msra.mxu0 %v116
    %395 = vmatprep.subr.mxu0 0.0
    %396 = vmatpush1.msra.mxu0 %v119
    %397 = vmatprep.subr.mxu0 0.0
    %398 = vmatpush1.msra.mxu0 %v122
    %399 = vmatprep.subr.mxu0 0.0
    %400 = vmatpush1.msra.mxu0 %v125
    %401 = vmatprep.subr.mxu0 0.0
    %402 = vmatpush1.msra.mxu0 %v128
    %403 = vmatprep.subr.mxu0 0.0
    %404 = vmatpush1.msra.mxu0 %v131
    %405 = vmatprep.subr.mxu0 0.0
    %406 = vmatpush1.msra.mxu0 %v134
    %407 = vmatprep.subr.mxu0 0.0
    %408 = vmatpush1.msra.mxu0 0.0
    %409 = vmatprep.subr.mxu0 0.0
    %410 = vmatpush1.msra.mxu0 0.0
    %411 = vmatprep.subr.mxu0 0.0
    %412 = vmatpush1.msra.mxu0 0.0
    %413 = vmatprep.subr.mxu0 0.0
    %414 = vmatpush1.msra.mxu0 0.0
    %415 = vmatprep.subr.mxu0 0.0
    %416 = vmatpush1.msra.mxu0 0.0
    %417 = vmatprep.subr.mxu0 0.0
    %418 = vmatpush1.msra.mxu0 0.0
    %419 = vmatprep.subr.mxu0 0.0
    %420 = vmatpush1.msra.mxu0 0.0
    %421 = vmatprep.subr.mxu0 0.0
    %422 = vmatpush1.msra.mxu0 0.0
    %423 = vmatprep.subr.mxu0 0.0
    %424 = vmatpush1.msra.mxu0 0.0
    %425 = vmatprep.subr.mxu0 0.0
    %426 = vmatpush1.msra.mxu0 0.0
    %427 = vmatprep.subr.mxu0 0.0
    %428 = vmatpush1.msra.mxu0 0.0
    %429 = vmatprep.subr.mxu0 0.0
    %430 = vmatpush1.msra.mxu0 0.0
    %431 = vmatprep.subr.mxu0 0.0
    %432 = vmatpush1.msra.mxu0 0.0
    %433 = vmatprep.subr.mxu0 0.0
    %434 = vmatpush1.msra.mxu0 0.0
    %435 = vmatprep.subr.mxu0 0.0
    %436 = vmatpush1.msra.mxu0 0.0
    %437 = vmatprep.subr.mxu0 0.0
    %438 = vmatpush1.msra.mxu0 0.0
    %439 = vmatprep.mubr.f32.mxu0 0.0
    %440 = vmatmul.mubr.f32.gmra.mrb[0].mxu0 0.0
    %v441 = vpop.f32.mrb[0].mxu0
    %v442 = vadd.f32 0.0, %v441
    %v443 = vpop.f32.mrb[0].mxu0
    %444 = vdwg.mxu0
    %v445 = vadd.f32 %v223, %v371
    %v446 = vxor.u32 %v445, 2147483648
    %v447 = vmul.f32 %v446, 1.442695
    %v448 = vpow.pop %v447
    %v449 = vadd.f32 %v448, 1.0
    %v450 = vrcp.pop %v449
    %v451 = vmul.f32 1.0, %v450
    %v452 = vadd.f32 %v225, %v373
    %v453 = vxor.u32 %v452, 2147483648
    %v454 = vmul.f32 %v453, 1.442695
    %v455 = vpow.pop %v454
    %v456 = vadd.f32 %v455, 1.0
    %v457 = vrcp.pop %v456
    %v458 = vmul.f32 1.0, %v457
    %v459 = vadd.f32 %v442, %v302
    %v460 = vmul.f32 %v451, %v459
    %v461 = vadd.f32 %v294, %v460
    %v462 = vtanh.pop %v461
    %v463 = vsub.f32 1.0, %v458
    %v464 = vmul.f32 %v463, %v462
    %v465 = vmul.f32 %v458, 0.0
    %v466 = vadd.f32 %v464, %v465
    %467 = vst [vmem:[#allocation2] sm:$0xff] %v466
    %468 = vmatprep.subr.mxu0 %v88
    %469 = vmatpush1.msra.mxu0 %v87
    %470 = vmatprep.subr.mxu0 %v91
    %471 = vmatpush1.msra.mxu0 %v90
    %472 = vmatprep.subr.mxu0 %v94
    %473 = vmatpush1.msra.mxu0 %v93
    %474 = vmatprep.subr.mxu0 %v97
    %475 = vmatpush1.msra.mxu0 %v96
    %476 = vmatprep.subr.mxu0 %v100
    %477 = vmatpush1.msra.mxu0 %v99
    %478 = vmatprep.subr.mxu0 %v103
    %479 = vmatpush1.msra.mxu0 %v102
    %480 = vmatprep.subr.mxu0 %v106
    %481 = vmatpush1.msra.mxu0 %v105
    %482 = vmatprep.subr.mxu0 %v109
    %483 = vmatpush1.msra.mxu0 %v108
    %484 = vmatprep.subr.mxu0 %v112
    %485 = vmatpush1.msra.mxu0 %v111
    %486 = vmatprep.subr.mxu0 %v115
    %487 = vmatpush1.msra.mxu0 %v114
    %488 = vmatprep.subr.mxu0 %v118
    %489 = vmatpush1.msra.mxu0 %v117
    %490 = vmatprep.subr.mxu0 %v121
    %491 = vmatpush1.msra.mxu0 %v120
    %492 = vmatprep.subr.mxu0 %v124
    %493 = vmatpush1.msra.mxu0 %v123
    %494 = vmatprep.subr.mxu0 %v127
    %495 = vmatpush1.msra.mxu0 %v126
    %496 = vmatprep.subr.mxu0 %v130
    %497 = vmatpush1.msra.mxu0 %v129
    %498 = vmatprep.subr.mxu0 %v133
    %499 = vmatpush1.msra.mxu0 %v132
    %500 = vmatprep.subr.mxu0 0.0
    %501 = vmatpush1.msra.mxu0 0.0
    %502 = vmatprep.subr.mxu0 0.0
    %503 = vmatpush1.msra.mxu0 0.0
    %504 = vmatprep.subr.mxu0 0.0
    %505 = vmatpush1.msra.mxu0 0.0
    %506 = vmatprep.subr.mxu0 0.0
    %507 = vmatpush1.msra.mxu0 0.0
    %508 = vmatprep.subr.mxu0 0.0
    %509 = vmatpush1.msra.mxu0 0.0
    %510 = vmatprep.subr.mxu0 0.0
    %511 = vmatpush1.msra.mxu0 0.0
    %512 = vmatprep.subr.mxu0 0.0
    %513 = vmatpush1.msra.mxu0 0.0
    %514 = vmatprep.subr.mxu0 0.0
    %515 = vmatpush1.msra.mxu0 0.0
    %516 = vmatprep.subr.mxu0 0.0
    %517 = vmatpush1.msra.mxu0 0.0
    %518 = vmatprep.subr.mxu0 0.0
    %519 = vmatpush1.msra.mxu0 0.0
    %520 = vmatprep.subr.mxu0 0.0
    %521 = vmatpush1.msra.mxu0 0.0
    %522 = vmatprep.subr.mxu0 0.0
    %523 = vmatpush1.msra.mxu0 0.0
    %524 = vmatprep.subr.mxu0 0.0
    %525 = vmatpush1.msra.mxu0 0.0
    %526 = vmatprep.subr.mxu0 0.0
    %527 = vmatpush1.msra.mxu0 0.0
    %528 = vmatprep.subr.mxu0 0.0
    %529 = vmatpush1.msra.mxu0 0.0
    %530 = vmatprep.subr.mxu0 0.0
    %531 = vmatpush1.msra.mxu0 0.0
    %532 = vmatprep.mubr.f32.mxu0 0.0
    %533 = vmatmul.mubr.f32.gmra.mrb[0].mxu0 %v466
    %v534 = vpop.f32.mrb[0].mxu0
    %v535 = vadd.f32 0.0, %v534
    %v536 = vpop.f32.mrb[0].mxu0
    %v537 = vadd.f32 0.0, %v536
    %538 = vdwg.mxu0
    %539 = vmatprep.subr.mxu0 0.0
    %540 = vmatpush1.msra.mxu0 %v89
    %541 = vmatprep.subr.mxu0 0.0
    %542 = vmatpush1.msra.mxu0 %v92
    %543 = vmatprep.subr.mxu0 0.0
    %544 = vmatpush1.msra.mxu0 %v95
    %545 = vmatprep.subr.mxu0 0.0
    %546 = vmatpush1.msra.mxu0 %v98
    %547 = vmatprep.subr.mxu0 0.0
    %548 = vmatpush1.msra.mxu0 %v101
    %549 = vmatprep.subr.mxu0 0.0
    %550 = vmatpush1.msra.mxu0 %v104
    %551 = vmatprep.subr.mxu0 0.0
    %552 = vmatpush1.msra.mxu0 %v107
    %553 = vmatprep.subr.mxu0 0.0
    %554 = vmatpush1.msra.mxu0 %v110
    %555 = vmatprep.subr.mxu0 0.0
    %556 = vmatpush1.msra.mxu0 %v113
    %557 = vmatprep.subr.mxu0 0.0
    %558 = vmatpush1.msra.mxu0 %v116
    %559 = vmatprep.subr.mxu0 0.0
    %560 = vmatpush1.msra.mxu0 %v119
    %561 = vmatprep.subr.mxu0 0.0
    %562 = vmatpush1.msra.mxu0 %v122
    %563 = vmatprep.subr.mxu0 0.0
    %564 = vmatpush1.msra.mxu0 %v125
    %565 = vmatprep.subr.mxu0 0.0
    %566 = vmatpush1.msra.mxu0 %v128
    %567 = vmatprep.subr.mxu0 0.0
    %568 = vmatpush1.msra.mxu0 %v131
    %569 = vmatprep.subr.mxu0 0.0
    %570 = vmatpush1.msra.mxu0 %v134
    %571 = vmatprep.subr.mxu0 0.0
    %572 = vmatpush1.msra.mxu0 0.0
    %573 = vmatprep.subr.mxu0 0.0
    %574 = vmatpush1.msra.mxu0 0.0
    %575 = vmatprep.subr.mxu0 0.0
    %576 = vmatpush1.msra.mxu0 0.0
    %577 = vmatprep.subr.mxu0 0.0
    %578 = vmatpush1.msra.mxu0 0.0
    %579 = vmatprep.subr.mxu0 0.0
    %580 = vmatpush1.msra.mxu0 0.0
    %581 = vmatprep.subr.mxu0 0.0
    %582 = vmatpush1.msra.mxu0 0.0
    %583 = vmatprep.subr.mxu0 0.0
    %584 = vmatpush1.msra.mxu0 0.0
    %585 = vmatprep.subr.mxu0 0.0
    %586 = vmatpush1.msra.mxu0 0.0
    %587 = vmatprep.subr.mxu0 0.0
    %588 = vmatpush1.msra.mxu0 0.0
    %589 = vmatprep.subr.mxu0 0.0
    %590 = vmatpush1.msra.mxu0 0.0
    %591 = vmatprep.subr.mxu0 0.0
    %592 = vmatpush1.msra.mxu0 0.0
    %593 = vmatprep.subr.mxu0 0.0
    %594 = vmatpush1.msra.mxu0 0.0
    %595 = vmatprep.subr.mxu0 0.0
    %596 = vmatpush1.msra.mxu0 0.0
    %597 = vmatprep.subr.mxu0 0.0
    %598 = vmatpush1.msra.mxu0 0.0
    %599 = vmatprep.subr.mxu0 0.0
    %600 = vmatpush1.msra.mxu0 0.0
    %601 = vmatprep.subr.mxu0 0.0
    %602 = vmatpush1.msra.mxu0 0.0
    %603 = vmatprep.mubr.f32.mxu0 0.0
    %604 = vmatmul.mubr.f32.gmra.mrb[0].mxu0 %v466
    %v605 = vpop.f32.mrb[0].mxu0
    %v606 = vadd.f32 0.0, %v605
    %v607 = vpop.f32.mrb[0].mxu0
    %608 = vdwg.mxu0
    %v609 = vadd.f32 %v223, %v535
    %v610 = vxor.u32 %v609, 2147483648
    %v611 = vmul.f32 %v610, 1.442695
    %v612 = vpow.pop %v611
    %v613 = vadd.f32 %v612, 1.0
    %v614 = vrcp.pop %v613
    %v615 = vmul.f32 1.0, %v614
    %v616 = vadd.f32 %v225, %v537
    %v617 = vxor.u32 %v616, 2147483648
    %v618 = vmul.f32 %v617, 1.442695
    %v619 = vpow.pop %v618
    %v620 = vadd.f32 %v619, 1.0
    %v621 = vrcp.pop %v620
    %v622 = vmul.f32 1.0, %v621
    %v623 = vadd.f32 %v606, %v302
    %v624 = vmul.f32 %v615, %v623
    %v625 = vadd.f32 %v294, %v624
    %v626 = vtanh.pop %v625
    %v627 = vsub.f32 1.0, %v622
    %v628 = vmul.f32 %v627, %v626
    %v629 = vmul.f32 %v622, %v466
    %v630 = vadd.f32 %v628, %v629
    %s631 = scalar_lea.vmem [#allocation2], 8
    %632 = vst [vmem:[%s631] sm:$0xff] %v630
    %633 = vmatprep.subr.mxu0 %v88
    %634 = vmatpush1.msra.mxu0 %v87
    %635 = vmatprep.subr.mxu0 %v91
    %636 = vmatpush1.msra.mxu0 %v90
    %637 = vmatprep.subr.mxu0 %v94
    %638 = vmatpush1.msra.mxu0 %v93
    %639 = vmatprep.subr.mxu0 %v97
    %640 = vmatpush1.msra.mxu0 %v96
    %641 = vmatprep.subr.mxu0 %v100
    %642 = vmatpush1.msra.mxu0 %v99
    %643 = vmatprep.subr.mxu0 %v103
    %644 = vmatpush1.msra.mxu0 %v102
    %645 = vmatprep.subr.mxu0 %v106
    %646 = vmatpush1.msra.mxu0 %v105
    %647 = vmatprep.subr.mxu0 %v109
    %648 = vmatpush1.msra.mxu0 %v108
    %649 = vmatprep.subr.mxu0 %v112
    %650 = vmatpush1.msra.mxu0 %v111
    %651 = vmatprep.subr.mxu0 %v115
    %652 = vmatpush1.msra.mxu0 %v114
    %653 = vmatprep.subr.mxu0 %v118
    %654 = vmatpush1.msra.mxu0 %v117
    %655 = vmatprep.subr.mxu0 %v121
    %656 = vmatpush1.msra.mxu0 %v120
    %657 = vmatprep.subr.mxu0 %v124
    %658 = vmatpush1.msra.mxu0 %v123
    %659 = vmatprep.subr.mxu0 %v127
    %660 = vmatpush1.msra.mxu0 %v126
    %661 = vmatprep.subr.mxu0 %v130
    %662 = vmatpush1.msra.mxu0 %v129
    %663 = vmatprep.subr.mxu0 %v133
    %664 = vmatpush1.msra.mxu0 %v132
    %665 = vmatprep.subr.mxu0 0.0
    %666 = vmatpush1.msra.mxu0 0.0
    %667 = vmatprep.subr.mxu0 0.0
    %668 = vmatpush1.msra.mxu0 0.0
    %669 = vmatprep.subr.mxu0 0.0
    %670 = vmatpush1.msra.mxu0 0.0
    %671 = vmatprep.subr.mxu0 0.0
    %672 = vmatpush1.msra.mxu0 0.0
    %673 = vmatprep.subr.mxu0 0.0
    %674 = vmatpush1.msra.mxu0 0.0
    %675 = vmatprep.subr.mxu0 0.0
    %676 = vmatpush1.msra.mxu0 0.0
    %677 = vmatprep.subr.mxu0 0.0
    %678 = vmatpush1.msra.mxu0 0.0
    %679 = vmatprep.subr.mxu0 0.0
    %680 = vmatpush1.msra.mxu0 0.0
    %681 = vmatprep.subr.mxu0 0.0
    %682 = vmatpush1.msra.mxu0 0.0
    %683 = vmatprep.subr.mxu0 0.0
    %684 = vmatpush1.msra.mxu0 0.0
    %685 = vmatprep.subr.mxu0 0.0
    %686 = vmatpush1.msra.mxu0 0.0
    %687 = vmatprep.subr.mxu0 0.0
    %688 = vmatpush1.msra.mxu0 0.0
    %689 = vmatprep.subr.mxu0 0.0
    %690 = vmatpush1.msra.mxu0 0.0
    %691 = vmatprep.subr.mxu0 0.0
    %692 = vmatpush1.msra.mxu0 0.0
    %693 = vmatprep.subr.mxu0 0.0
    %694 = vmatpush1.msra.mxu0 0.0
    %695 = vmatprep.subr.mxu0 0.0
    %696 = vmatpush1.msra.mxu0 0.0
    %697 = vmatprep.mubr.f32.mxu0 0.0
    %698 = vmatmul.mubr.f32.gmra.mrb[0].mxu0 %v630
    %v699 = vpop.f32.mrb[0].mxu0
    %v700 = vadd.f32 0.0, %v699
    %v701 = vpop.f32.mrb[0].mxu0
    %v702 = vadd.f32 0.0, %v701
    %703 = vdwg.mxu0
    %704 = vmatprep.subr.mxu0 0.0
    %705 = vmatpush1.msra.mxu0 %v89
    %706 = vmatprep.subr.mxu0 0.0
    %707 = vmatpush1.msra.mxu0 %v92
    %708 = vmatprep.subr.mxu0 0.0
    %709 = vmatpush1.msra.mxu0 %v95
    %710 = vmatprep.subr.mxu0 0.0
    %711 = vmatpush1.msra.mxu0 %v98
    %712 = vmatprep.subr.mxu0 0.0
    %713 = vmatpush1.msra.mxu0 %v101
    %714 = vmatprep.subr.mxu0 0.0
    %715 = vmatpush1.msra.mxu0 %v104
    %716 = vmatprep.subr.mxu0 0.0
    %717 = vmatpush1.msra.mxu0 %v107
    %718 = vmatprep.subr.mxu0 0.0
    %719 = vmatpush1.msra.mxu0 %v110
    %720 = vmatprep.subr.mxu0 0.0
    %721 = vmatpush1.msra.mxu0 %v113
    %722 = vmatprep.subr.mxu0 0.0
    %723 = vmatpush1.msra.mxu0 %v116
    %724 = vmatprep.subr.mxu0 0.0
    %725 = vmatpush1.msra.mxu0 %v119
    %726 = vmatprep.subr.mxu0 0.0
    %727 = vmatpush1.msra.mxu0 %v122
    %728 = vmatprep.subr.mxu0 0.0
    %729 = vmatpush1.msra.mxu0 %v125
    %730 = vmatprep.subr.mxu0 0.0
    %731 = vmatpush1.msra.mxu0 %v128
    %732 = vmatprep.subr.mxu0 0.0
    %733 = vmatpush1.msra.mxu0 %v131
    %734 = vmatprep.subr.mxu0 0.0
    %735 = vmatpush1.msra.mxu0 %v134
    %736 = vmatprep.subr.mxu0 0.0
    %737 = vmatpush1.msra.mxu0 0.0
    %738 = vmatprep.subr.mxu0 0.0
    %739 = vmatpush1.msra.mxu0 0.0
    %740 = vmatprep.subr.mxu0 0.0
    %741 = vmatpush1.msra.mxu0 0.0
    %742 = vmatprep.subr.mxu0 0.0
    %743 = vmatpush1.msra.mxu0 0.0
    %744 = vmatprep.subr.mxu0 0.0
    %745 = vmatpush1.msra.mxu0 0.0
    %746 = vmatprep.subr.mxu0 0.0
    %747 = vmatpush1.msra.mxu0 0.0
    %748 = vmatprep.subr.mxu0 0.0
    %749 = vmatpush1.msra.mxu0 0.0
    %750 = vmatprep.subr.mxu0 0.0
    %751 = vmatpush1.msra.mxu0 0.0
    %752 = vmatprep.subr.mxu0 0.0
    %753 = vmatpush1.msra.mxu0 0.0
    %754 = vmatprep.subr.mxu0 0.0
    %755 = vmatpush1.msra.mxu0 0.0
    %756 = vmatprep.subr.mxu0 0.0
    %757 = vmatpush1.msra.mxu0 0.0
    %758 = vmatprep.subr.mxu0 0.0
    %759 = vmatpush1.msra.mxu0 0.0
    %760 = vmatprep.subr.mxu0 0.0
    %761 = vmatpush1.msra.mxu0 0.0
    %762 = vmatprep.subr.mxu0 0.0
    %763 = vmatpush1.msra.mxu0 0.0
    %764 = vmatprep.subr.mxu0 0.0
    %765 = vmatpush1.msra.mxu0 0.0
    %766 = vmatprep.subr.mxu0 0.0
    %767 = vmatpush1.msra.mxu0 0.0
    %768 = vmatprep.mubr.f32.mxu0 0.0
    %769 = vmatmul.mubr.f32.gmra.mrb[0].mxu0 %v630
    %v770 = vpop.f32.mrb[0].mxu0
    %v771 = vadd.f32 0.0, %v770
    %v772 = vpop.f32.mrb[0].mxu0
    %773 = vdwg.mxu0
    %v774 = vadd.f32 %v223, %v700
    %v775 = vxor.u32 %v774, 2147483648
    %v776 = vmul.f32 %v775, 1.442695
    %v777 = vpow.pop %v776
    %v778 = vadd.f32 %v777, 1.0
    %v779 = vrcp.pop %v778
    %v780 = vmul.f32 1.0, %v779
    %v781 = vadd.f32 %v225, %v702
    %v782 = vxor.u32 %v781, 2147483648
    %v783 = vmul.f32 %v782, 1.442695
    %v784 = vpow.pop %v783
    %v785 = vadd.f32 %v784, 1.0
    %v786 = vrcp.pop %v785
    %v787 = vmul.f32 1.0, %v786
    %v788 = vadd.f32 %v771, %v302
    %v789 = vmul.f32 %v780, %v788
    %v790 = vadd.f32 %v294, %v789
    %v791 = vtanh.pop %v790
    %v792 = vsub.f32 1.0, %v787
    %v793 = vmul.f32 %v792, %v791
    %v794 = vmul.f32 %v787, %v630
    %v795 = vadd.f32 %v793, %v794
    %s796 = scalar_lea.vmem [#allocation2], 16
    %797 = vst [vmem:[%s796] sm:$0xff] %v795
    %798 = vmatprep.subr.mxu0 %v88
    %799 = vmatpush1.msra.mxu0 %v87
    %800 = vmatprep.subr.mxu0 %v91
    %801 = vmatpush1.msra.mxu0 %v90
    %802 = vmatprep.subr.mxu0 %v94
    %803 = vmatpush1.msra.mxu0 %v93
    %804 = vmatprep.subr.mxu0 %v97
    %805 = vmatpush1.msra.mxu0 %v96
    %806 = vmatprep.subr.mxu0 %v100
    %807 = vmatpush1.msra.mxu0 %v99
    %808 = vmatprep.subr.mxu0 %v103
    %809 = vmatpush1.msra.mxu0 %v102
    %810 = vmatprep.subr.mxu0 %v106
    %811 = vmatpush1.msra.mxu0 %v105
    %812 = vmatprep.subr.mxu0 %v109
    %813 = vmatpush1.msra.mxu0 %v108
    %814 = vmatprep.subr.mxu0 %v112
    %815 = vmatpush1.msra.mxu0 %v111
    %816 = vmatprep.subr.mxu0 %v115
    %817 = vmatpush1.msra.mxu0 %v114
    %818 = vmatprep.subr.mxu0 %v118
    %819 = vmatpush1.msra.mxu0 %v117
    %820 = vmatprep.subr.mxu0 %v121
    %821 = vmatpush1.msra.mxu0 %v120
    %822 = vmatprep.subr.mxu0 %v124
    %823 = vmatpush1.msra.mxu0 %v123
    %824 = vmatprep.subr.mxu0 %v127
    %825 = vmatpush1.msra.mxu0 %v126
    %826 = vmatprep.subr.mxu0 %v130
    %827 = vmatpush1.msra.mxu0 %v129
    %828 = vmatprep.subr.mxu0 %v133
    %829 = vmatpush1.msra.mxu0 %v132
    %830 = vmatprep.subr.mxu0 0.0
    %831 = vmatpush1.msra.mxu0 0.0
    %832 = vmatprep.subr.mxu0 0.0
    %833 = vmatpush1.msra.mxu0 0.0
    %834 = vmatprep.subr.mxu0 0.0
    %835 = vmatpush1.msra.mxu0 0.0
    %836 = vmatprep.subr.mxu0 0.0
    %837 = vmatpush1.msra.mxu0 0.0
    %838 = vmatprep.subr.mxu0 0.0
    %839 = vmatpush1.msra.mxu0 0.0
    %840 = vmatprep.subr.mxu0 0.0
    %841 = vmatpush1.msra.mxu0 0.0
    %842 = vmatprep.subr.mxu0 0.0
    %843 = vmatpush1.msra.mxu0 0.0
    %844 = vmatprep.subr.mxu0 0.0
    %845 = vmatpush1.msra.mxu0 0.0
    %846 = vmatprep.subr.mxu0 0.0
    %847 = vmatpush1.msra.mxu0 0.0
    %848 = vmatprep.subr.mxu0 0.0
    %849 = vmatpush1.msra.mxu0 0.0
    %850 = vmatprep.subr.mxu0 0.0
    %851 = vmatpush1.msra.mxu0 0.0
    %852 = vmatprep.subr.mxu0 0.0
    %853 = vmatpush1.msra.mxu0 0.0
    %854 = vmatprep.subr.mxu0 0.0
    %855 = vmatpush1.msra.mxu0 0.0
    %856 = vmatprep.subr.mxu0 0.0
    %857 = vmatpush1.msra.mxu0 0.0
    %858 = vmatprep.subr.mxu0 0.0
    %859 = vmatpush1.msra.mxu0 0.0
    %860 = vmatprep.subr.mxu0 0.0
    %861 = vmatpush1.msra.mxu0 0.0
    %862 = vmatprep.mubr.f32.mxu0 0.0
    %863 = vmatmul.mubr.f32.gmra.mrb[0].mxu0 %v795
    %v864 = vpop.f32.mrb[0].mxu0
    %v865 = vadd.f32 0.0, %v864
    %v866 = vpop.f32.mrb[0].mxu0
    %v867 = vadd.f32 0.0, %v866
    %868 = vdwg.mxu0
    %869 = vmatprep.subr.mxu0 0.0
    %870 = vmatpush1.msra.mxu0 %v89
    %871 = vmatprep.subr.mxu0 0.0
    %872 = vmatpush1.msra.mxu0 %v92
    %873 = vmatprep.subr.mxu0 0.0
    %874 = vmatpush1.msra.mxu0 %v95
    %875 = vmatprep.subr.mxu0 0.0
    %876 = vmatpush1.msra.mxu0 %v98
    %877 = vmatprep.subr.mxu0 0.0
    %878 = vmatpush1.msra.mxu0 %v101
    %879 = vmatprep.subr.mxu0 0.0
    %880 = vmatpush1.msra.mxu0 %v104
    %881 = vmatprep.subr.mxu0 0.0
    %882 = vmatpush1.msra.mxu0 %v107
    %883 = vmatprep.subr.mxu0 0.0
    %884 = vmatpush1.msra.mxu0 %v110
    %885 = vmatprep.subr.mxu0 0.0
    %886 = vmatpush1.msra.mxu0 %v113
    %887 = vmatprep.subr.mxu0 0.0
    %888 = vmatpush1.msra.mxu0 %v116
    %889 = vmatprep.subr.mxu0 0.0
    %890 = vmatpush1.msra.mxu0 %v119
    %891 = vmatprep.subr.mxu0 0.0
    %892 = vmatpush1.msra.mxu0 %v122
    %893 = vmatprep.subr.mxu0 0.0
    %894 = vmatpush1.msra.mxu0 %v125
    %895 = vmatprep.subr.mxu0 0.0
    %896 = vmatpush1.msra.mxu0 %v128
    %897 = vmatprep.subr.mxu0 0.0
    %898 = vmatpush1.msra.mxu0 %v131
    %899 = vmatprep.subr.mxu0 0.0
    %900 = vmatpush1.msra.mxu0 %v134
    %901 = vmatprep.subr.mxu0 0.0
    %902 = vmatpush1.msra.mxu0 0.0
    %903 = vmatprep.subr.mxu0 0.0
    %904 = vmatpush1.msra.mxu0 0.0
    %905 = vmatprep.subr.mxu0 0.0
    %906 = vmatpush1.msra.mxu0 0.0
    %907 = vmatprep.subr.mxu0 0.0
    %908 = vmatpush1.msra.mxu0 0.0
    %909 = vmatprep.subr.mxu0 0.0
    %910 = vmatpush1.msra.mxu0 0.0
    %911 = vmatprep.subr.mxu0 0.0
    %912 = vmatpush1.msra.mxu0 0.0
    %913 = vmatprep.subr.mxu0 0.0
    %914 = vmatpush1.msra.mxu0 0.0
    %915 = vmatprep.subr.mxu0 0.0
    %916 = vmatpush1.msra.mxu0 0.0
    %917 = vmatprep.subr.mxu0 0.0
    %918 = vmatpush1.msra.mxu0 0.0
    %919 = vmatprep.subr.mxu0 0.0
    %920 = vmatpush1.msra.mxu0 0.0
    %921 = vmatprep.subr.mxu0 0.0
    %922 = vmatpush1.msra.mxu0 0.0
    %923 = vmatprep.subr.mxu0 0.0
    %924 = vmatpush1.msra.mxu0 0.0
    %925 = vmatprep.subr.mxu0 0.0
    %926 = vmatpush1.msra.mxu0 0.0
    %927 = vmatprep.subr.mxu0 0.0
    %928 = vmatpush1.msra.mxu0 0.0
    %929 = vmatprep.subr.mxu0 0.0
    %930 = vmatpush1.msra.mxu0 0.0
    %931 = vmatprep.subr.mxu0 0.0
    %932 = vmatpush1.msra.mxu0 0.0
    %933 = vmatprep.mubr.f32.mxu0 0.0
    %934 = vmatmul.mubr.f32.gmra.mrb[0].mxu0 %v795
    %v935 = vpop.f32.mrb[0].mxu0
    %v936 = vadd.f32 0.0, %v935
    %v937 = vpop.f32.mrb[0].mxu0
    %938 = vdwg.mxu0
    %v939 = vadd.f32 %v223, %v865
    %v940 = vxor.u32 %v939, 2147483648
    %v941 = vmul.f32 %v940, 1.442695
    %v942 = vpow.pop %v941
    %v943 = vadd.f32 %v942, 1.0
    %v944 = vrcp.pop %v943
    %v945 = vmul.f32 1.0, %v944
    %v946 = vadd.f32 %v225, %v867
    %v947 = vxor.u32 %v946, 2147483648
    %v948 = vmul.f32 %v947, 1.442695
    %v949 = vpow.pop %v948
    %v950 = vadd.f32 %v949, 1.0
    %v951 = vrcp.pop %v950
    %v952 = vmul.f32 1.0, %v951
    %v953 = vadd.f32 %v936, %v302
    %v954 = vmul.f32 %v945, %v953
    %v955 = vadd.f32 %v294, %v954
    %v956 = vtanh.pop %v955
    %v957 = vsub.f32 1.0, %v952
    %v958 = vmul.f32 %v957, %v956
    %v959 = vmul.f32 %v952, %v795
    %v960 = vadd.f32 %v958, %v959
    %s961 = scalar_lea.vmem [#allocation2], 24
    %962 = vst [vmem:[%s961] sm:$0xff] %v960
    %963 = vmatprep.subr.mxu0 %v88
    %964 = vmatpush1.msra.mxu0 %v87
    %965 = vmatprep.subr.mxu0 %v91
    %966 = vmatpush1.msra.mxu0 %v90
    %967 = vmatprep.subr.mxu0 %v94
    %968 = vmatpush1.msra.mxu0 %v93
    %969 = vmatprep.subr.mxu0 %v97
    %970 = vmatpush1.msra.mxu0 %v96
    %971 = vmatprep.subr.mxu0 %v100
    %972 = vmatpush1.msra.mxu0 %v99
    %973 = vmatprep.subr.mxu0 %v103
    %974 = vmatpush1.msra.mxu0 %v102
    %975 = vmatprep.subr.mxu0 %v106
    %976 = vmatpush1.msra.mxu0 %v105
    %977 = vmatprep.subr.mxu0 %v109
    %978 = vmatpush1.msra.mxu0 %v108
    %979 = vmatprep.subr.mxu0 %v112
    %980 = vmatpush1.msra.mxu0 %v111
    %981 = vmatprep.subr.mxu0 %v115
    %982 = vmatpush1.msra.mxu0 %v114
    %983 = vmatprep.subr.mxu0 %v118
    %984 = vmatpush1.msra.mxu0 %v117
    %985 = vmatprep.subr.mxu0 %v121
    %986 = vmatpush1.msra.mxu0 %v120
    %987 = vmatprep.subr.mxu0 %v124
    %988 = vmatpush1.msra.mxu0 %v123
    %989 = vmatprep.subr.mxu0 %v127
    %990 = vmatpush1.msra.mxu0 %v126
    %991 = vmatprep.subr.mxu0 %v130
    %992 = vmatpush1.msra.mxu0 %v129
    %993 = vmatprep.subr.mxu0 %v133
    %994 = vmatpush1.msra.mxu0 %v132
    %995 = vmatprep.subr.mxu0 0.0
    %996 = vmatpush1.msra.mxu0 0.0
    %997 = vmatprep.subr.mxu0 0.0
    %998 = vmatpush1.msra.mxu0 0.0
    %999 = vmatprep.subr.mxu0 0.0
    %1000 = vmatpush1.msra.mxu0 0.0
    %1001 = vmatprep.subr.mxu0 0.0
    %1002 = vmatpush1.msra.mxu0 0.0
    %1003 = vmatprep.subr.mxu0 0.0
    %1004 = vmatpush1.msra.mxu0 0.0
    %1005 = vmatprep.subr.mxu0 0.0
    %1006 = vmatpush1.msra.mxu0 0.0
    %1007 = vmatprep.subr.mxu0 0.0
    %1008 = vmatpush1.msra.mxu0 0.0
    %1009 = vmatprep.subr.mxu0 0.0
    %1010 = vmatpush1.msra.mxu0 0.0
    %1011 = vmatprep.subr.mxu0 0.0
    %1012 = vmatpush1.msra.mxu0 0.0
    %1013 = vmatprep.subr.mxu0 0.0
    %1014 = vmatpush1.msra.mxu0 0.0
    %1015 = vmatprep.subr.mxu0 0.0
    %1016 = vmatpush1.msra.mxu0 0.0
    %1017 = vmatprep.subr.mxu0 0.0
    %1018 = vmatpush1.msra.mxu0 0.0
    %1019 = vmatprep.subr.mxu0 0.0
    %1020 = vmatpush1.msra.mxu0 0.0
    %1021 = vmatprep.subr.mxu0 0.0
    %1022 = vmatpush1.msra.mxu0 0.0
    %1023 = vmatprep.subr.mxu0 0.0
    %1024 = vmatpush1.msra.mxu0 0.0
    %1025 = vmatprep.subr.mxu0 0.0
    %1026 = vmatpush1.msra.mxu0 0.0
    %1027 = vmatprep.mubr.f32.mxu0 0.0
    %1028 = vmatmul.mubr.f32.gmra.mrb[0].mxu0 %v960
    %v1029 = vpop.f32.mrb[0].mxu0
    %v1030 = vadd.f32 0.0, %v1029
    %v1031 = vpop.f32.mrb[0].mxu0
    %v1032 = vadd.f32 0.0, %v1031
    %1033 = vdwg.mxu0
    %1034 = vmatprep.subr.mxu0 0.0
    %1035 = vmatpush1.msra.mxu0 %v89
    %1036 = vmatprep.subr.mxu0 0.0
    %1037 = vmatpush1.msra.mxu0 %v92
    %1038 = vmatprep.subr.mxu0 0.0
    %1039 = vmatpush1.msra.mxu0 %v95
    %1040 = vmatprep.subr.mxu0 0.0
    %1041 = vmatpush1.msra.mxu0 %v98
    %1042 = vmatprep.subr.mxu0 0.0
    %1043 = vmatpush1.msra.mxu0 %v101
    %1044 = vmatprep.subr.mxu0 0.0
    %1045 = vmatpush1.msra.mxu0 %v104
    %1046 = vmatprep.subr.mxu0 0.0
    %1047 = vmatpush1.msra.mxu0 %v107
    %1048 = vmatprep.subr.mxu0 0.0
    %1049 = vmatpush1.msra.mxu0 %v110
    %1050 = vmatprep.subr.mxu0 0.0
    %1051 = vmatpush1.msra.mxu0 %v113
    %1052 = vmatprep.subr.mxu0 0.0
    %1053 = vmatpush1.msra.mxu0 %v116
    %1054 = vmatprep.subr.mxu0 0.0
    %1055 = vmatpush1.msra.mxu0 %v119
    %1056 = vmatprep.subr.mxu0 0.0
    %1057 = vmatpush1.msra.mxu0 %v122
    %1058 = vmatprep.subr.mxu0 0.0
    %1059 = vmatpush1.msra.mxu0 %v125
    %1060 = vmatprep.subr.mxu0 0.0
    %1061 = vmatpush1.msra.mxu0 %v128
    %1062 = vmatprep.subr.mxu0 0.0
    %1063 = vmatpush1.msra.mxu0 %v131
    %1064 = vmatprep.subr.mxu0 0.0
    %1065 = vmatpush1.msra.mxu0 %v134
    %1066 = vmatprep.subr.mxu0 0.0
    %1067 = vmatpush1.msra.mxu0 0.0
    %1068 = vmatprep.subr.mxu0 0.0
    %1069 = vmatpush1.msra.mxu0 0.0
    %1070 = vmatprep.subr.mxu0 0.0
    %1071 = vmatpush1.msra.mxu0 0.0
    %1072 = vmatprep.subr.mxu0 0.0
    %1073 = vmatpush1.msra.mxu0 0.0
    %1074 = vmatprep.subr.mxu0 0.0
    %1075 = vmatpush1.msra.mxu0 0.0
    %1076 = vmatprep.subr.mxu0 0.0
    %1077 = vmatpush1.msra.mxu0 0.0
    %1078 = vmatprep.subr.mxu0 0.0
    %1079 = vmatpush1.msra.mxu0 0.0
    %1080 = vmatprep.subr.mxu0 0.0
    %1081 = vmatpush1.msra.mxu0 0.0
    %1082 = vmatprep.subr.mxu0 0.0
    %1083 = vmatpush1.msra.mxu0 0.0
    %1084 = vmatprep.subr.mxu0 0.0
    %1085 = vmatpush1.msra.mxu0 0.0
    %1086 = vmatprep.subr.mxu0 0.0
    %1087 = vmatpush1.msra.mxu0 0.0
    %1088 = vmatprep.subr.mxu0 0.0
    %1089 = vmatpush1.msra.mxu0 0.0
    %1090 = vmatprep.subr.mxu0 0.0
    %1091 = vmatpush1.msra.mxu0 0.0
    %1092 = vmatprep.subr.mxu0 0.0
    %1093 = vmatpush1.msra.mxu0 0.0
    %1094 = vmatprep.subr.mxu0 0.0
    %1095 = vmatpush1.msra.mxu0 0.0
    %1096 = vmatprep.subr.mxu0 0.0
    %1097 = vmatpush1.msra.mxu0 0.0
    %1098 = vmatprep.mubr.f32.mxu0 0.0
    %1099 = vmatmul.mubr.f32.gmra.mrb[0].mxu0 %v960
    %v1100 = vpop.f32.mrb[0].mxu0
    %v1101 = vadd.f32 0.0, %v1100
    %v1102 = vpop.f32.mrb[0].mxu0
    %1103 = vdwg.mxu0
    %v1104 = vadd.f32 %v223, %v1030
    %v1105 = vxor.u32 %v1104, 2147483648
    %v1106 = vmul.f32 %v1105, 1.442695
    %v1107 = vpow.pop %v1106
    %v1108 = vadd.f32 %v1107, 1.0
    %v1109 = vrcp.pop %v1108
    %v1110 = vmul.f32 1.0, %v1109
    %v1111 = vadd.f32 %v225, %v1032
    %v1112 = vxor.u32 %v1111, 2147483648
    %v1113 = vmul.f32 %v1112, 1.442695
    %v1114 = vpow.pop %v1113
    %v1115 = vadd.f32 %v1114, 1.0
    %v1116 = vrcp.pop %v1115
    %v1117 = vmul.f32 1.0, %v1116
    %v1118 = vadd.f32 %v1101, %v302
    %v1119 = vmul.f32 %v1110, %v1118
    %v1120 = vadd.f32 %v294, %v1119
    %v1121 = vtanh.pop %v1120
    %v1122 = vsub.f32 1.0, %v1117
    %v1123 = vmul.f32 %v1122, %v1121
    %v1124 = vmul.f32 %v1117, %v960
    %v1125 = vadd.f32 %v1123, %v1124
    %s1126 = scalar_lea.vmem [#allocation2], 32
    %1127 = vst [vmem:[%s1126] sm:$0xff] %v1125
    %1128 = vmatprep.subr.mxu0 %v88
    %1129 = vmatpush1.msra.mxu0 %v87
    %1130 = vmatprep.subr.mxu0 %v91
    %1131 = vmatpush1.msra.mxu0 %v90
    %1132 = vmatprep.subr.mxu0 %v94
    %1133 = vmatpush1.msra.mxu0 %v93
    %1134 = vmatprep.subr.mxu0 %v97
    %1135 = vmatpush1.msra.mxu0 %v96
    %1136 = vmatprep.subr.mxu0 %v100
    %1137 = vmatpush1.msra.mxu0 %v99
    %1138 = vmatprep.subr.mxu0 %v103
    %1139 = vmatpush1.msra.mxu0 %v102
    %1140 = vmatprep.subr.mxu0 %v106
    %1141 = vmatpush1.msra.mxu0 %v105
    %1142 = vmatprep.subr.mxu0 %v109
    %1143 = vmatpush1.msra.mxu0 %v108
    %1144 = vmatprep.subr.mxu0 %v112
    %1145 = vmatpush1.msra.mxu0 %v111
    %1146 = vmatprep.subr.mxu0 %v115
    %1147 = vmatpush1.msra.mxu0 %v114
    %1148 = vmatprep.subr.mxu0 %v118
    %1149 = vmatpush1.msra.mxu0 %v117
    %1150 = vmatprep.subr.mxu0 %v121
    %1151 = vmatpush1.msra.mxu0 %v120
    %1152 = vmatprep.subr.mxu0 %v124
    %1153 = vmatpush1.msra.mxu0 %v123
    %1154 = vmatprep.subr.mxu0 %v127
    %1155 = vmatpush1.msra.mxu0 %v126
    %1156 = vmatprep.subr.mxu0 %v130
    %1157 = vmatpush1.msra.mxu0 %v129
    %1158 = vmatprep.subr.mxu0 %v133
    %1159 = vmatpush1.msra.mxu0 %v132
    %1160 = vmatprep.subr.mxu0 0.0
    %1161 = vmatpush1.msra.mxu0 0.0
    %1162 = vmatprep.subr.mxu0 0.0
    %1163 = vmatpush1.msra.mxu0 0.0
    %1164 = vmatprep.subr.mxu0 0.0
    %1165 = vmatpush1.msra.mxu0 0.0
    %1166 = vmatprep.subr.mxu0 0.0
    %1167 = vmatpush1.msra.mxu0 0.0
    %1168 = vmatprep.subr.mxu0 0.0
    %1169 = vmatpush1.msra.mxu0 0.0
    %1170 = vmatprep.subr.mxu0 0.0
    %1171 = vmatpush1.msra.mxu0 0.0
    %1172 = vmatprep.subr.mxu0 0.0
    %1173 = vmatpush1.msra.mxu0 0.0
    %1174 = vmatprep.subr.mxu0 0.0
    %1175 = vmatpush1.msra.mxu0 0.0
    %1176 = vmatprep.subr.mxu0 0.0
    %1177 = vmatpush1.msra.mxu0 0.0
    %1178 = vmatprep.subr.mxu0 0.0
    %1179 = vmatpush1.msra.mxu0 0.0
    %1180 = vmatprep.subr.mxu0 0.0
    %1181 = vmatpush1.msra.mxu0 0.0
    %1182 = vmatprep.subr.mxu0 0.0
    %1183 = vmatpush1.msra.mxu0 0.0
    %1184 = vmatprep.subr.mxu0 0.0
    %1185 = vmatpush1.msra.mxu0 0.0
    %1186 = vmatprep.subr.mxu0 0.0
    %1187 = vmatpush1.msra.mxu0 0.0
    %1188 = vmatprep.subr.mxu0 0.0
    %1189 = vmatpush1.msra.mxu0 0.0
    %1190 = vmatprep.subr.mxu0 0.0
    %1191 = vmatpush1.msra.mxu0 0.0
    %1192 = vmatprep.mubr.f32.mxu0 0.0
    %1193 = vmatmul.mubr.f32.gmra.mrb[0].mxu0 %v1125
    %v1194 = vpop.f32.mrb[0].mxu0
    %v1195 = vadd.f32 0.0, %v1194
    %v1196 = vpop.f32.mrb[0].mxu0
    %v1197 = vadd.f32 0.0, %v1196
    %1198 = vdwg.mxu0
    %1199 = vmatprep.subr.mxu0 0.0
    %1200 = vmatpush1.msra.mxu0 %v89
    %1201 = vmatprep.subr.mxu0 0.0
    %1202 = vmatpush1.msra.mxu0 %v92
    %1203 = vmatprep.subr.mxu0 0.0
    %1204 = vmatpush1.msra.mxu0 %v95
    %1205 = vmatprep.subr.mxu0 0.0
    %1206 = vmatpush1.msra.mxu0 %v98
    %1207 = vmatprep.subr.mxu0 0.0
    %1208 = vmatpush1.msra.mxu0 %v101
    %1209 = vmatprep.subr.mxu0 0.0
    %1210 = vmatpush1.msra.mxu0 %v104
    %1211 = vmatprep.subr.mxu0 0.0
    %1212 = vmatpush1.msra.mxu0 %v107
    %1213 = vmatprep.subr.mxu0 0.0
    %1214 = vmatpush1.msra.mxu0 %v110
    %1215 = vmatprep.subr.mxu0 0.0
    %1216 = vmatpush1.msra.mxu0 %v113
    %1217 = vmatprep.subr.mxu0 0.0
    %1218 = vmatpush1.msra.mxu0 %v116
    %1219 = vmatprep.subr.mxu0 0.0
    %1220 = vmatpush1.msra.mxu0 %v119
    %1221 = vmatprep.subr.mxu0 0.0
    %1222 = vmatpush1.msra.mxu0 %v122
    %1223 = vmatprep.subr.mxu0 0.0
    %1224 = vmatpush1.msra.mxu0 %v125
    %1225 = vmatprep.subr.mxu0 0.0
    %1226 = vmatpush1.msra.mxu0 %v128
    %1227 = vmatprep.subr.mxu0 0.0
    %1228 = vmatpush1.msra.mxu0 %v131
    %1229 = vmatprep.subr.mxu0 0.0
    %1230 = vmatpush1.msra.mxu0 %v134
    %1231 = vmatprep.subr.mxu0 0.0
    %1232 = vmatpush1.msra.mxu0 0.0
    %1233 = vmatprep.subr.mxu0 0.0
    %1234 = vmatpush1.msra.mxu0 0.0
    %1235 = vmatprep.subr.mxu0 0.0
    %1236 = vmatpush1.msra.mxu0 0.0
    %1237 = vmatprep.subr.mxu0 0.0
    %1238 = vmatpush1.msra.mxu0 0.0
    %1239 = vmatprep.subr.mxu0 0.0
    %1240 = vmatpush1.msra.mxu0 0.0
    %1241 = vmatprep.subr.mxu0 0.0
    %1242 = vmatpush1.msra.mxu0 0.0
    %1243 = vmatprep.subr.mxu0 0.0
    %1244 = vmatpush1.msra.mxu0 0.0
    %1245 = vmatprep.subr.mxu0 0.0
    %1246 = vmatpush1.msra.mxu0 0.0
    %1247 = vmatprep.subr.mxu0 0.0
    %1248 = vmatpush1.msra.mxu0 0.0
    %1249 = vmatprep.subr.mxu0 0.0
    %1250 = vmatpush1.msra.mxu0 0.0
    %1251 = vmatprep.subr.mxu0 0.0
    %1252 = vmatpush1.msra.mxu0 0.0
    %1253 = vmatprep.subr.mxu0 0.0
    %1254 = vmatpush1.msra.mxu0 0.0
    %1255 = vmatprep.subr.mxu0 0.0
    %1256 = vmatpush1.msra.mxu0 0.0
    %1257 = vmatprep.subr.mxu0 0.0
    %1258 = vmatpush1.msra.mxu0 0.0
    %1259 = vmatprep.subr.mxu0 0.0
    %1260 = vmatpush1.msra.mxu0 0.0
    %1261 = vmatprep.subr.mxu0 0.0
    %1262 = vmatpush1.msra.mxu0 0.0
    %1263 = vmatprep.mubr.f32.mxu0 0.0
    %1264 = vmatmul.mubr.f32.gmra.mrb[0].mxu0 %v1125
    %v1265 = vpop.f32.mrb[0].mxu0
    %v1266 = vadd.f32 0.0, %v1265
    %v1267 = vpop.f32.mrb[0].mxu0
    %1268 = vdwg.mxu0
    %v1269 = vadd.f32 %v223, %v1195
    %v1270 = vxor.u32 %v1269, 2147483648
    %v1271 = vmul.f32 %v1270, 1.442695
    %v1272 = vpow.pop %v1271
    %v1273 = vadd.f32 %v1272, 1.0
    %v1274 = vrcp.pop %v1273
    %v1275 = vmul.f32 1.0, %v1274
    %v1276 = vadd.f32 %v225, %v1197
    %v1277 = vxor.u32 %v1276, 2147483648
    %v1278 = vmul.f32 %v1277, 1.442695
    %v1279 = vpow.pop %v1278
    %v1280 = vadd.f32 %v1279, 1.0
    %v1281 = vrcp.pop %v1280
    %v1282 = vmul.f32 1.0, %v1281
    %v1283 = vadd.f32 %v1266, %v302
    %v1284 = vmul.f32 %v1275, %v1283
    %v1285 = vadd.f32 %v294, %v1284
    %v1286 = vtanh.pop %v1285
    %v1287 = vsub.f32 1.0, %v1282
    %v1288 = vmul.f32 %v1287, %v1286
    %v1289 = vmul.f32 %v1282, %v1125
    %v1290 = vadd.f32 %v1288, %v1289
    %s1291 = scalar_lea.vmem [#allocation2], 40
    %1292 = vst [vmem:[%s1291] sm:$0xff] %v1290
    %1293 = vmatprep.subr.mxu0 %v88
    %1294 = vmatpush1.msra.mxu0 %v87
    %1295 = vmatprep.subr.mxu0 %v91
    %1296 = vmatpush1.msra.mxu0 %v90
    %1297 = vmatprep.subr.mxu0 %v94
    %1298 = vmatpush1.msra.mxu0 %v93
    %1299 = vmatprep.subr.mxu0 %v97
    %1300 = vmatpush1.msra.mxu0 %v96
    %1301 = vmatprep.subr.mxu0 %v100
    %1302 = vmatpush1.msra.mxu0 %v99
    %1303 = vmatprep.subr.mxu0 %v103
    %1304 = vmatpush1.msra.mxu0 %v102
    %1305 = vmatprep.subr.mxu0 %v106
    %1306 = vmatpush1.msra.mxu0 %v105
    %1307 = vmatprep.subr.mxu0 %v109
    %1308 = vmatpush1.msra.mxu0 %v108
    %1309 = vmatprep.subr.mxu0 %v112
    %1310 = vmatpush1.msra.mxu0 %v111
    %1311 = vmatprep.subr.mxu0 %v115
    %1312 = vmatpush1.msra.mxu0 %v114
    %1313 = vmatprep.subr.mxu0 %v118
    %1314 = vmatpush1.msra.mxu0 %v117
    %1315 = vmatprep.subr.mxu0 %v121
    %1316 = vmatpush1.msra.mxu0 %v120
    %1317 = vmatprep.subr.mxu0 %v124
    %1318 = vmatpush1.msra.mxu0 %v123
    %1319 = vmatprep.subr.mxu0 %v127
    %1320 = vmatpush1.msra.mxu0 %v126
    %1321 = vmatprep.subr.mxu0 %v130
    %1322 = vmatpush1.msra.mxu0 %v129
    %1323 = vmatprep.subr.mxu0 %v133
    %1324 = vmatpush1.msra.mxu0 %v132
    %1325 = vmatprep.subr.mxu0 0.0
    %1326 = vmatpush1.msra.mxu0 0.0
    %1327 = vmatprep.subr.mxu0 0.0
    %1328 = vmatpush1.msra.mxu0 0.0
    %1329 = vmatprep.subr.mxu0 0.0
    %1330 = vmatpush1.msra.mxu0 0.0
    %1331 = vmatprep.subr.mxu0 0.0
    %1332 = vmatpush1.msra.mxu0 0.0
    %1333 = vmatprep.subr.mxu0 0.0
    %1334 = vmatpush1.msra.mxu0 0.0
    %1335 = vmatprep.subr.mxu0 0.0
    %1336 = vmatpush1.msra.mxu0 0.0
    %1337 = vmatprep.subr.mxu0 0.0
    %1338 = vmatpush1.msra.mxu0 0.0
    %1339 = vmatprep.subr.mxu0 0.0
    %1340 = vmatpush1.msra.mxu0 0.0
    %1341 = vmatprep.subr.mxu0 0.0
    %1342 = vmatpush1.msra.mxu0 0.0
    %1343 = vmatprep.subr.mxu0 0.0
    %1344 = vmatpush1.msra.mxu0 0.0
    %1345 = vmatprep.subr.mxu0 0.0
    %1346 = vmatpush1.msra.mxu0 0.0
    %1347 = vmatprep.subr.mxu0 0.0
    %1348 = vmatpush1.msra.mxu0 0.0
    %1349 = vmatprep.subr.mxu0 0.0
    %1350 = vmatpush1.msra.mxu0 0.0
    %1351 = vmatprep.subr.mxu0 0.0
    %1352 = vmatpush1.msra.mxu0 0.0
    %1353 = vmatprep.subr.mxu0 0.0
    %1354 = vmatpush1.msra.mxu0 0.0
    %1355 = vmatprep.subr.mxu0 0.0
    %1356 = vmatpush1.msra.mxu0 0.0
    %1357 = vmatprep.mubr.f32.mxu0 0.0
    %1358 = vmatmul.mubr.f32.gmra.mrb[0].mxu0 %v1290
    %v1359 = vpop.f32.mrb[0].mxu0
    %v1360 = vadd.f32 0.0, %v1359
    %v1361 = vpop.f32.mrb[0].mxu0
    %v1362 = vadd.f32 0.0, %v1361
    %1363 = vdwg.mxu0
    %1364 = vmatprep.subr.mxu0 0.0
    %1365 = vmatpush1.msra.mxu0 %v89
    %1366 = vmatprep.subr.mxu0 0.0
    %1367 = vmatpush1.msra.mxu0 %v92
    %1368 = vmatprep.subr.mxu0 0.0
    %1369 = vmatpush1.msra.mxu0 %v95
    %1370 = vmatprep.subr.mxu0 0.0
    %1371 = vmatpush1.msra.mxu0 %v98
    %1372 = vmatprep.subr.mxu0 0.0
    %1373 = vmatpush1.msra.mxu0 %v101
    %1374 = vmatprep.subr.mxu0 0.0
    %1375 = vmatpush1.msra.mxu0 %v104
    %1376 = vmatprep.subr.mxu0 0.0
    %1377 = vmatpush1.msra.mxu0 %v107
    %1378 = vmatprep.subr.mxu0 0.0
    %1379 = vmatpush1.msra.mxu0 %v110
    %1380 = vmatprep.subr.mxu0 0.0
    %1381 = vmatpush1.msra.mxu0 %v113
    %1382 = vmatprep.subr.mxu0 0.0
    %1383 = vmatpush1.msra.mxu0 %v116
    %1384 = vmatprep.subr.mxu0 0.0
    %1385 = vmatpush1.msra.mxu0 %v119
    %1386 = vmatprep.subr.mxu0 0.0
    %1387 = vmatpush1.msra.mxu0 %v122
    %1388 = vmatprep.subr.mxu0 0.0
    %1389 = vmatpush1.msra.mxu0 %v125
    %1390 = vmatprep.subr.mxu0 0.0
    %1391 = vmatpush1.msra.mxu0 %v128
    %1392 = vmatprep.subr.mxu0 0.0
    %1393 = vmatpush1.msra.mxu0 %v131
    %1394 = vmatprep.subr.mxu0 0.0
    %1395 = vmatpush1.msra.mxu0 %v134
    %1396 = vmatprep.subr.mxu0 0.0
    %1397 = vmatpush1.msra.mxu0 0.0
    %1398 = vmatprep.subr.mxu0 0.0
    %1399 = vmatpush1.msra.mxu0 0.0
    %1400 = vmatprep.subr.mxu0 0.0
    %1401 = vmatpush1.msra.mxu0 0.0
    %1402 = vmatprep.subr.mxu0 0.0
    %1403 = vmatpush1.msra.mxu0 0.0
    %1404 = vmatprep.subr.mxu0 0.0
    %1405 = vmatpush1.msra.mxu0 0.0
    %1406 = vmatprep.subr.mxu0 0.0
    %1407 = vmatpush1.msra.mxu0 0.0
    %1408 = vmatprep.subr.mxu0 0.0
    %1409 = vmatpush1.msra.mxu0 0.0
    %1410 = vmatprep.subr.mxu0 0.0
    %1411 = vmatpush1.msra.mxu0 0.0
    %1412 = vmatprep.subr.mxu0 0.0
    %1413 = vmatpush1.msra.mxu0 0.0
    %1414 = vmatprep.subr.mxu0 0.0
    %1415 = vmatpush1.msra.mxu0 0.0
    %1416 = vmatprep.subr.mxu0 0.0
    %1417 = vmatpush1.msra.mxu0 0.0
    %1418 = vmatprep.subr.mxu0 0.0
    %1419 = vmatpush1.msra.mxu0 0.0
    %1420 = vmatprep.subr.mxu0 0.0
    %1421 = vmatpush1.msra.mxu0 0.0
    %1422 = vmatprep.subr.mxu0 0.0
    %1423 = vmatpush1.msra.mxu0 0.0
    %1424 = vmatprep.subr.mxu0 0.0
    %1425 = vmatpush1.msra.mxu0 0.0
    %1426 = vmatprep.subr.mxu0 0.0
    %1427 = vmatpush1.msra.mxu0 0.0
    %1428 = vmatprep.mubr.f32.mxu0 0.0
    %1429 = vmatmul.mubr.f32.gmra.mrb[0].mxu0 %v1290
    %v1430 = vpop.f32.mrb[0].mxu0
    %v1431 = vadd.f32 0.0, %v1430
    %v1432 = vpop.f32.mrb[0].mxu0
    %1433 = vdwg.mxu0
    %v1434 = vadd.f32 %v223, %v1360
    %v1435 = vxor.u32 %v1434, 2147483648
    %v1436 = vmul.f32 %v1435, 1.442695
    %v1437 = vpow.pop %v1436
    %v1438 = vadd.f32 %v1437, 1.0
    %v1439 = vrcp.pop %v1438
    %v1440 = vmul.f32 1.0, %v1439
    %v1441 = vadd.f32 %v225, %v1362
    %v1442 = vxor.u32 %v1441, 2147483648
    %v1443 = vmul.f32 %v1442, 1.442695
    %v1444 = vpow.pop %v1443
    %v1445 = vadd.f32 %v1444, 1.0
    %v1446 = vrcp.pop %v1445
    %v1447 = vmul.f32 1.0, %v1446
    %v1448 = vadd.f32 %v1431, %v302
    %v1449 = vmul.f32 %v1440, %v1448
    %v1450 = vadd.f32 %v294, %v1449
    %v1451 = vtanh.pop %v1450
    %v1452 = vsub.f32 1.0, %v1447
    %v1453 = vmul.f32 %v1452, %v1451
    %v1454 = vmul.f32 %v1447, %v1290
    %v1455 = vadd.f32 %v1453, %v1454
    %s1456 = scalar_lea.vmem [#allocation2], 48
    %1457 = vst [vmem:[%s1456] sm:$0xff] %v1455
    %1458 = vmatprep.subr.mxu0 %v88
    %1459 = vmatpush1.msra.mxu0 %v87
    %1460 = vmatprep.subr.mxu0 %v91
    %1461 = vmatpush1.msra.mxu0 %v90
    %1462 = vmatprep.subr.mxu0 %v94
    %1463 = vmatpush1.msra.mxu0 %v93
    %1464 = vmatprep.subr.mxu0 %v97
    %1465 = vmatpush1.msra.mxu0 %v96
    %1466 = vmatprep.subr.mxu0 %v100
    %1467 = vmatpush1.msra.mxu0 %v99
    %1468 = vmatprep.subr.mxu0 %v103
    %1469 = vmatpush1.msra.mxu0 %v102
    %1470 = vmatprep.subr.mxu0 %v106
    %1471 = vmatpush1.msra.mxu0 %v105
    %1472 = vmatprep.subr.mxu0 %v109
    %1473 = vmatpush1.msra.mxu0 %v108
    %1474 = vmatprep.subr.mxu0 %v112
    %1475 = vmatpush1.msra.mxu0 %v111
    %1476 = vmatprep.subr.mxu0 %v115
    %1477 = vmatpush1.msra.mxu0 %v114
    %1478 = vmatprep.subr.mxu0 %v118
    %1479 = vmatpush1.msra.mxu0 %v117
    %1480 = vmatprep.subr.mxu0 %v121
    %1481 = vmatpush1.msra.mxu0 %v120
    %1482 = vmatprep.subr.mxu0 %v124
    %1483 = vmatpush1.msra.mxu0 %v123
    %1484 = vmatprep.subr.mxu0 %v127
    %1485 = vmatpush1.msra.mxu0 %v126
    %1486 = vmatprep.subr.mxu0 %v130
    %1487 = vmatpush1.msra.mxu0 %v129
    %1488 = vmatprep.subr.mxu0 %v133
    %1489 = vmatpush1.msra.mxu0 %v132
    %1490 = vmatprep.subr.mxu0 0.0
    %1491 = vmatpush1.msra.mxu0 0.0
    %1492 = vmatprep.subr.mxu0 0.0
    %1493 = vmatpush1.msra.mxu0 0.0
    %1494 = vmatprep.subr.mxu0 0.0
    %1495 = vmatpush1.msra.mxu0 0.0
    %1496 = vmatprep.subr.mxu0 0.0
    %1497 = vmatpush1.msra.mxu0 0.0
    %1498 = vmatprep.subr.mxu0 0.0
    %1499 = vmatpush1.msra.mxu0 0.0
    %1500 = vmatprep.subr.mxu0 0.0
    %1501 = vmatpush1.msra.mxu0 0.0
    %1502 = vmatprep.subr.mxu0 0.0
    %1503 = vmatpush1.msra.mxu0 0.0
    %1504 = vmatprep.subr.mxu0 0.0
    %1505 = vmatpush1.msra.mxu0 0.0
    %1506 = vmatprep.subr.mxu0 0.0
    %1507 = vmatpush1.msra.mxu0 0.0
    %1508 = vmatprep.subr.mxu0 0.0
    %1509 = vmatpush1.msra.mxu0 0.0
    %1510 = vmatprep.subr.mxu0 0.0
    %1511 = vmatpush1.msra.mxu0 0.0
    %1512 = vmatprep.subr.mxu0 0.0
    %1513 = vmatpush1.msra.mxu0 0.0
    %1514 = vmatprep.subr.mxu0 0.0
    %1515 = vmatpush1.msra.mxu0 0.0
    %1516 = vmatprep.subr.mxu0 0.0
    %1517 = vmatpush1.msra.mxu0 0.0
    %1518 = vmatprep.subr.mxu0 0.0
    %1519 = vmatpush1.msra.mxu0 0.0
    %1520 = vmatprep.subr.mxu0 0.0
    %1521 = vmatpush1.msra.mxu0 0.0
    %1522 = vmatprep.mubr.f32.mxu0 0.0
    %1523 = vmatmul.mubr.f32.gmra.mrb[0].mxu0 %v1455
    %v1524 = vpop.f32.mrb[0].mxu0
    %v1525 = vadd.f32 0.0, %v1524
    %v1526 = vpop.f32.mrb[0].mxu0
    %v1527 = vadd.f32 0.0, %v1526
    %1528 = vdwg.mxu0
    %1529 = vmatprep.subr.mxu0 0.0
    %1530 = vmatpush1.msra.mxu0 %v89
    %1531 = vmatprep.subr.mxu0 0.0
    %1532 = vmatpush1.msra.mxu0 %v92
    %1533 = vmatprep.subr.mxu0 0.0
    %1534 = vmatpush1.msra.mxu0 %v95
    %1535 = vmatprep.subr.mxu0 0.0
    %1536 = vmatpush1.msra.mxu0 %v98
    %1537 = vmatprep.subr.mxu0 0.0
    %1538 = vmatpush1.msra.mxu0 %v101
    %1539 = vmatprep.subr.mxu0 0.0
    %1540 = vmatpush1.msra.mxu0 %v104
    %1541 = vmatprep.subr.mxu0 0.0
    %1542 = vmatpush1.msra.mxu0 %v107
    %1543 = vmatprep.subr.mxu0 0.0
    %1544 = vmatpush1.msra.mxu0 %v110
    %1545 = vmatprep.subr.mxu0 0.0
    %1546 = vmatpush1.msra.mxu0 %v113
    %1547 = vmatprep.subr.mxu0 0.0
    %1548 = vmatpush1.msra.mxu0 %v116
    %1549 = vmatprep.subr.mxu0 0.0
    %1550 = vmatpush1.msra.mxu0 %v119
    %1551 = vmatprep.subr.mxu0 0.0
    %1552 = vmatpush1.msra.mxu0 %v122
    %1553 = vmatprep.subr.mxu0 0.0
    %1554 = vmatpush1.msra.mxu0 %v125
    %1555 = vmatprep.subr.mxu0 0.0
    %1556 = vmatpush1.msra.mxu0 %v128
    %1557 = vmatprep.subr.mxu0 0.0
    %1558 = vmatpush1.msra.mxu0 %v131
    %1559 = vmatprep.subr.mxu0 0.0
    %1560 = vmatpush1.msra.mxu0 %v134
    %1561 = vmatprep.subr.mxu0 0.0
    %1562 = vmatpush1.msra.mxu0 0.0
    %1563 = vmatprep.subr.mxu0 0.0
    %1564 = vmatpush1.msra.mxu0 0.0
    %1565 = vmatprep.subr.mxu0 0.0
    %1566 = vmatpush1.msra.mxu0 0.0
    %1567 = vmatprep.subr.mxu0 0.0
    %1568 = vmatpush1.msra.mxu0 0.0
    %1569 = vmatprep.subr.mxu0 0.0
    %1570 = vmatpush1.msra.mxu0 0.0
    %1571 = vmatprep.subr.mxu0 0.0
    %1572 = vmatpush1.msra.mxu0 0.0
    %1573 = vmatprep.subr.mxu0 0.0
    %1574 = vmatpush1.msra.mxu0 0.0
    %1575 = vmatprep.subr.mxu0 0.0
    %1576 = vmatpush1.msra.mxu0 0.0
    %1577 = vmatprep.subr.mxu0 0.0
    %1578 = vmatpush1.msra.mxu0 0.0
    %1579 = vmatprep.subr.mxu0 0.0
    %1580 = vmatpush1.msra.mxu0 0.0
    %1581 = vmatprep.subr.mxu0 0.0
    %1582 = vmatpush1.msra.mxu0 0.0
    %1583 = vmatprep.subr.mxu0 0.0
    %1584 = vmatpush1.msra.mxu0 0.0
    %1585 = vmatprep.subr.mxu0 0.0
    %1586 = vmatpush1.msra.mxu0 0.0
    %1587 = vmatprep.subr.mxu0 0.0
    %1588 = vmatpush1.msra.mxu0 0.0
    %1589 = vmatprep.subr.mxu0 0.0
    %1590 = vmatpush1.msra.mxu0 0.0
    %1591 = vmatprep.subr.mxu0 0.0
    %1592 = vmatpush1.msra.mxu0 0.0
    %1593 = vmatprep.mubr.f32.mxu0 0.0
    %1594 = vmatmul.mubr.f32.gmra.mrb[0].mxu0 %v1455
    %v1595 = vpop.f32.mrb[0].mxu0
    %v1596 = vadd.f32 0.0, %v1595
    %v1597 = vpop.f32.mrb[0].mxu0
    %1598 = vdwg.mxu0
    %v1599 = vadd.f32 %v223, %v1525
    %v1600 = vxor.u32 %v1599, 2147483648
    %v1601 = vmul.f32 %v1600, 1.442695
    %v1602 = vpow.pop %v1601
    %v1603 = vadd.f32 %v1602, 1.0
    %v1604 = vrcp.pop %v1603
    %v1605 = vmul.f32 1.0, %v1604
    %v1606 = vadd.f32 %v225, %v1527
    %v1607 = vxor.u32 %v1606, 2147483648
    %v1608 = vmul.f32 %v1607, 1.442695
    %v1609 = vpow.pop %v1608
    %v1610 = vadd.f32 %v1609, 1.0
    %v1611 = vrcp.pop %v1610
    %v1612 = vmul.f32 1.0, %v1611
    %v1613 = vadd.f32 %v1596, %v302
    %v1614 = vmul.f32 %v1605, %v1613
    %v1615 = vadd.f32 %v294, %v1614
    %v1616 = vtanh.pop %v1615
    %v1617 = vsub.f32 1.0, %v1612
    %v1618 = vmul.f32 %v1617, %v1616
    %v1619 = vmul.f32 %v1612, %v1455
    %v1620 = vadd.f32 %v1618, %v1619
    %s1621 = scalar_lea.vmem [#allocation2], 56
    %1622 = vst [vmem:[%s1621] sm:$0xff] %v1620
    %1623 = vmatprep.subr.mxu0 %v88
    %1624 = vmatpush1.msra.mxu0 %v87
    %1625 = vmatprep.subr.mxu0 %v91
    %1626 = vmatpush1.msra.mxu0 %v90
    %1627 = vmatprep.subr.mxu0 %v94
    %1628 = vmatpush1.msra.mxu0 %v93
    %1629 = vmatprep.subr.mxu0 %v97
    %1630 = vmatpush1.msra.mxu0 %v96
    %1631 = vmatprep.subr.mxu0 %v100
    %1632 = vmatpush1.msra.mxu0 %v99
    %1633 = vmatprep.subr.mxu0 %v103
    %1634 = vmatpush1.msra.mxu0 %v102
    %1635 = vmatprep.subr.mxu0 %v106
    %1636 = vmatpush1.msra.mxu0 %v105
    %1637 = vmatprep.subr.mxu0 %v109
    %1638 = vmatpush1.msra.mxu0 %v108
    %1639 = vmatprep.subr.mxu0 %v112
    %1640 = vmatpush1.msra.mxu0 %v111
    %1641 = vmatprep.subr.mxu0 %v115
    %1642 = vmatpush1.msra.mxu0 %v114
    %1643 = vmatprep.subr.mxu0 %v118
    %1644 = vmatpush1.msra.mxu0 %v117
    %1645 = vmatprep.subr.mxu0 %v121
    %1646 = vmatpush1.msra.mxu0 %v120
    %1647 = vmatprep.subr.mxu0 %v124
    %1648 = vmatpush1.msra.mxu0 %v123
    %1649 = vmatprep.subr.mxu0 %v127
    %1650 = vmatpush1.msra.mxu0 %v126
    %1651 = vmatprep.subr.mxu0 %v130
    %1652 = vmatpush1.msra.mxu0 %v129
    %1653 = vmatprep.subr.mxu0 %v133
    %1654 = vmatpush1.msra.mxu0 %v132
    %1655 = vmatprep.subr.mxu0 0.0
    %1656 = vmatpush1.msra.mxu0 0.0
    %1657 = vmatprep.subr.mxu0 0.0
    %1658 = vmatpush1.msra.mxu0 0.0
    %1659 = vmatprep.subr.mxu0 0.0
    %1660 = vmatpush1.msra.mxu0 0.0
    %1661 = vmatprep.subr.mxu0 0.0
    %1662 = vmatpush1.msra.mxu0 0.0
    %1663 = vmatprep.subr.mxu0 0.0
    %1664 = vmatpush1.msra.mxu0 0.0
    %1665 = vmatprep.subr.mxu0 0.0
    %1666 = vmatpush1.msra.mxu0 0.0
    %1667 = vmatprep.subr.mxu0 0.0
    %1668 = vmatpush1.msra.mxu0 0.0
    %1669 = vmatprep.subr.mxu0 0.0
    %1670 = vmatpush1.msra.mxu0 0.0
    %1671 = vmatprep.subr.mxu0 0.0
    %1672 = vmatpush1.msra.mxu0 0.0
    %1673 = vmatprep.subr.mxu0 0.0
    %1674 = vmatpush1.msra.mxu0 0.0
    %1675 = vmatprep.subr.mxu0 0.0
    %1676 = vmatpush1.msra.mxu0 0.0
    %1677 = vmatprep.subr.mxu0 0.0
    %1678 = vmatpush1.msra.mxu0 0.0
    %1679 = vmatprep.subr.mxu0 0.0
    %1680 = vmatpush1.msra.mxu0 0.0
    %1681 = vmatprep.subr.mxu0 0.0
    %1682 = vmatpush1.msra.mxu0 0.0
    %1683 = vmatprep.subr.mxu0 0.0
    %1684 = vmatpush1.msra.mxu0 0.0
    %1685 = vmatprep.subr.mxu0 0.0
    %1686 = vmatpush1.msra.mxu0 0.0
    %1687 = vmatprep.mubr.f32.mxu0 0.0
    %1688 = vmatmul.mubr.f32.gmra.mrb[0].mxu0 %v1620
    %v1689 = vpop.f32.mrb[0].mxu0
    %v1690 = vadd.f32 0.0, %v1689
    %v1691 = vpop.f32.mrb[0].mxu0
    %v1692 = vadd.f32 0.0, %v1691
    %1693 = vdwg.mxu0
    %1694 = vmatprep.subr.mxu0 0.0
    %1695 = vmatpush1.msra.mxu0 %v89
    %1696 = vmatprep.subr.mxu0 0.0
    %1697 = vmatpush1.msra.mxu0 %v92
    %1698 = vmatprep.subr.mxu0 0.0
    %1699 = vmatpush1.msra.mxu0 %v95
    %1700 = vmatprep.subr.mxu0 0.0
    %1701 = vmatpush1.msra.mxu0 %v98
    %1702 = vmatprep.subr.mxu0 0.0
    %1703 = vmatpush1.msra.mxu0 %v101
    %1704 = vmatprep.subr.mxu0 0.0
    %1705 = vmatpush1.msra.mxu0 %v104
    %1706 = vmatprep.subr.mxu0 0.0
    %1707 = vmatpush1.msra.mxu0 %v107
    %1708 = vmatprep.subr.mxu0 0.0
    %1709 = vmatpush1.msra.mxu0 %v110
    %1710 = vmatprep.subr.mxu0 0.0
    %1711 = vmatpush1.msra.mxu0 %v113
    %1712 = vmatprep.subr.mxu0 0.0
    %1713 = vmatpush1.msra.mxu0 %v116
    %1714 = vmatprep.subr.mxu0 0.0
    %1715 = vmatpush1.msra.mxu0 %v119
    %1716 = vmatprep.subr.mxu0 0.0
    %1717 = vmatpush1.msra.mxu0 %v122
    %1718 = vmatprep.subr.mxu0 0.0
    %1719 = vmatpush1.msra.mxu0 %v125
    %1720 = vmatprep.subr.mxu0 0.0
    %1721 = vmatpush1.msra.mxu0 %v128
    %1722 = vmatprep.subr.mxu0 0.0
    %1723 = vmatpush1.msra.mxu0 %v131
    %1724 = vmatprep.subr.mxu0 0.0
    %1725 = vmatpush1.msra.mxu0 %v134
    %1726 = vmatprep.subr.mxu0 0.0
    %1727 = vmatpush1.msra.mxu0 0.0
    %1728 = vmatprep.subr.mxu0 0.0
    %1729 = vmatpush1.msra.mxu0 0.0
    %1730 = vmatprep.subr.mxu0 0.0
    %1731 = vmatpush1.msra.mxu0 0.0
    %1732 = vmatprep.subr.mxu0 0.0
    %1733 = vmatpush1.msra.mxu0 0.0
    %1734 = vmatprep.subr.mxu0 0.0
    %1735 = vmatpush1.msra.mxu0 0.0
    %1736 = vmatprep.subr.mxu0 0.0
    %1737 = vmatpush1.msra.mxu0 0.0
    %1738 = vmatprep.subr.mxu0 0.0
    %1739 = vmatpush1.msra.mxu0 0.0
    %1740 = vmatprep.subr.mxu0 0.0
    %1741 = vmatpush1.msra.mxu0 0.0
    %1742 = vmatprep.subr.mxu0 0.0
    %1743 = vmatpush1.msra.mxu0 0.0
    %1744 = vmatprep.subr.mxu0 0.0
    %1745 = vmatpush1.msra.mxu0 0.0
    %1746 = vmatprep.subr.mxu0 0.0
    %1747 = vmatpush1.msra.mxu0 0.0
    %1748 = vmatprep.subr.mxu0 0.0
    %1749 = vmatpush1.msra.mxu0 0.0
    %1750 = vmatprep.subr.mxu0 0.0
    %1751 = vmatpush1.msra.mxu0 0.0
    %1752 = vmatprep.subr.mxu0 0.0
    %1753 = vmatpush1.msra.mxu0 0.0
    %1754 = vmatprep.subr.mxu0 0.0
    %1755 = vmatpush1.msra.mxu0 0.0
    %1756 = vmatprep.subr.mxu0 0.0
    %1757 = vmatpush1.msra.mxu0 0.0
    %1758 = vmatprep.mubr.f32.mxu0 0.0
    %1759 = vmatmul.mubr.f32.gmra.mrb[0].mxu0 %v1620
    %v1760 = vpop.f32.mrb[0].mxu0
    %v1761 = vadd.f32 0.0, %v1760
    %v1762 = vpop.f32.mrb[0].mxu0
    %1763 = vdwg.mxu0
    %v1764 = vadd.f32 %v223, %v1690
    %v1765 = vxor.u32 %v1764, 2147483648
    %v1766 = vmul.f32 %v1765, 1.442695
    %v1767 = vpow.pop %v1766
    %v1768 = vadd.f32 %v1767, 1.0
    %v1769 = vrcp.pop %v1768
    %v1770 = vmul.f32 1.0, %v1769
    %v1771 = vadd.f32 %v225, %v1692
    %v1772 = vxor.u32 %v1771, 2147483648
    %v1773 = vmul.f32 %v1772, 1.442695
    %v1774 = vpow.pop %v1773
    %v1775 = vadd.f32 %v1774, 1.0
    %v1776 = vrcp.pop %v1775
    %v1777 = vmul.f32 1.0, %v1776
    %v1778 = vadd.f32 %v1761, %v302
    %v1779 = vmul.f32 %v1770, %v1778
    %v1780 = vadd.f32 %v294, %v1779
    %v1781 = vtanh.pop %v1780
    %v1782 = vsub.f32 1.0, %v1777
    %v1783 = vmul.f32 %v1782, %v1781
    %v1784 = vmul.f32 %v1777, %v1620
    %v1785 = vadd.f32 %v1783, %v1784
    %s1786 = scalar_lea.vmem [#allocation2], 64
    %1787 = vst [vmem:[%s1786] sm:$0xff] %v1785
    %1788 = vmatprep.subr.mxu0 %v88
    %1789 = vmatpush1.msra.mxu0 %v87
    %1790 = vmatprep.subr.mxu0 %v91
    %1791 = vmatpush1.msra.mxu0 %v90
    %1792 = vmatprep.subr.mxu0 %v94
    %1793 = vmatpush1.msra.mxu0 %v93
    %1794 = vmatprep.subr.mxu0 %v97
    %1795 = vmatpush1.msra.mxu0 %v96
    %1796 = vmatprep.subr.mxu0 %v100
    %1797 = vmatpush1.msra.mxu0 %v99
    %1798 = vmatprep.subr.mxu0 %v103
    %1799 = vmatpush1.msra.mxu0 %v102
    %1800 = vmatprep.subr.mxu0 %v106
    %1801 = vmatpush1.msra.mxu0 %v105
    %1802 = vmatprep.subr.mxu0 %v109
    %1803 = vmatpush1.msra.mxu0 %v108
    %1804 = vmatprep.subr.mxu0 %v112
    %1805 = vmatpush1.msra.mxu0 %v111
    %1806 = vmatprep.subr.mxu0 %v115
    %1807 = vmatpush1.msra.mxu0 %v114
    %1808 = vmatprep.subr.mxu0 %v118
    %1809 = vmatpush1.msra.mxu0 %v117
    %1810 = vmatprep.subr.mxu0 %v121
    %1811 = vmatpush1.msra.mxu0 %v120
    %1812 = vmatprep.subr.mxu0 %v124
    %1813 = vmatpush1.msra.mxu0 %v123
    %1814 = vmatprep.subr.mxu0 %v127
    %1815 = vmatpush1.msra.mxu0 %v126
    %1816 = vmatprep.subr.mxu0 %v130
    %1817 = vmatpush1.msra.mxu0 %v129
    %1818 = vmatprep.subr.mxu0 %v133
    %1819 = vmatpush1.msra.mxu0 %v132
    %1820 = vmatprep.subr.mxu0 0.0
    %1821 = vmatpush1.msra.mxu0 0.0
    %1822 = vmatprep.subr.mxu0 0.0
    %1823 = vmatpush1.msra.mxu0 0.0
    %1824 = vmatprep.subr.mxu0 0.0
    %1825 = vmatpush1.msra.mxu0 0.0
    %1826 = vmatprep.subr.mxu0 0.0
    %1827 = vmatpush1.msra.mxu0 0.0
    %1828 = vmatprep.subr.mxu0 0.0
    %1829 = vmatpush1.msra.mxu0 0.0
    %1830 = vmatprep.subr.mxu0 0.0
    %1831 = vmatpush1.msra.mxu0 0.0
    %1832 = vmatprep.subr.mxu0 0.0
    %1833 = vmatpush1.msra.mxu0 0.0
    %1834 = vmatprep.subr.mxu0 0.0
    %1835 = vmatpush1.msra.mxu0 0.0
    %1836 = vmatprep.subr.mxu0 0.0
    %1837 = vmatpush1.msra.mxu0 0.0
    %1838 = vmatprep.subr.mxu0 0.0
    %1839 = vmatpush1.msra.mxu0 0.0
    %1840 = vmatprep.subr.mxu0 0.0
    %1841 = vmatpush1.msra.mxu0 0.0
    %1842 = vmatprep.subr.mxu0 0.0
    %1843 = vmatpush1.msra.mxu0 0.0
    %1844 = vmatprep.subr.mxu0 0.0
    %1845 = vmatpush1.msra.mxu0 0.0
    %1846 = vmatprep.subr.mxu0 0.0
    %1847 = vmatpush1.msra.mxu0 0.0
    %1848 = vmatprep.subr.mxu0 0.0
    %1849 = vmatpush1.msra.mxu0 0.0
    %1850 = vmatprep.subr.mxu0 0.0
    %1851 = vmatpush1.msra.mxu0 0.0
    %1852 = vmatprep.mubr.f32.mxu0 0.0
    %1853 = vmatmul.mubr.f32.gmra.mrb[0].mxu0 %v1785
    %v1854 = vpop.f32.mrb[0].mxu0
    %v1855 = vadd.f32 0.0, %v1854
    %v1856 = vpop.f32.mrb[0].mxu0
    %v1857 = vadd.f32 0.0, %v1856
    %1858 = vdwg.mxu0
    %1859 = vmatprep.subr.mxu0 0.0
    %1860 = vmatpush1.msra.mxu0 %v89
    %1861 = vmatprep.subr.mxu0 0.0
    %1862 = vmatpush1.msra.mxu0 %v92
    %1863 = vmatprep.subr.mxu0 0.0
    %1864 = vmatpush1.msra.mxu0 %v95
    %1865 = vmatprep.subr.mxu0 0.0
    %1866 = vmatpush1.msra.mxu0 %v98
    %1867 = vmatprep.subr.mxu0 0.0
    %1868 = vmatpush1.msra.mxu0 %v101
    %1869 = vmatprep.subr.mxu0 0.0
    %1870 = vmatpush1.msra.mxu0 %v104
    %1871 = vmatprep.subr.mxu0 0.0
    %1872 = vmatpush1.msra.mxu0 %v107
    %1873 = vmatprep.subr.mxu0 0.0
    %1874 = vmatpush1.msra.mxu0 %v110
    %1875 = vmatprep.subr.mxu0 0.0
    %1876 = vmatpush1.msra.mxu0 %v113
    %1877 = vmatprep.subr.mxu0 0.0
    %1878 = vmatpush1.msra.mxu0 %v116
    %1879 = vmatprep.subr.mxu0 0.0
    %1880 = vmatpush1.msra.mxu0 %v119
    %1881 = vmatprep.subr.mxu0 0.0
    %1882 = vmatpush1.msra.mxu0 %v122
    %1883 = vmatprep.subr.mxu0 0.0
    %1884 = vmatpush1.msra.mxu0 %v125
    %1885 = vmatprep.subr.mxu0 0.0
    %1886 = vmatpush1.msra.mxu0 %v128
    %1887 = vmatprep.subr.mxu0 0.0
    %1888 = vmatpush1.msra.mxu0 %v131
    %1889 = vmatprep.subr.mxu0 0.0
    %1890 = vmatpush1.msra.mxu0 %v134
    %1891 = vmatprep.subr.mxu0 0.0
    %1892 = vmatpush1.msra.mxu0 0.0
    %1893 = vmatprep.subr.mxu0 0.0
    %1894 = vmatpush1.msra.mxu0 0.0
    %1895 = vmatprep.subr.mxu0 0.0
    %1896 = vmatpush1.msra.mxu0 0.0
    %1897 = vmatprep.subr.mxu0 0.0
    %1898 = vmatpush1.msra.mxu0 0.0
    %1899 = vmatprep.subr.mxu0 0.0
    %1900 = vmatpush1.msra.mxu0 0.0
    %1901 = vmatprep.subr.mxu0 0.0
    %1902 = vmatpush1.msra.mxu0 0.0
    %1903 = vmatprep.subr.mxu0 0.0
    %1904 = vmatpush1.msra.mxu0 0.0
    %1905 = vmatprep.subr.mxu0 0.0
    %1906 = vmatpush1.msra.mxu0 0.0
    %1907 = vmatprep.subr.mxu0 0.0
    %1908 = vmatpush1.msra.mxu0 0.0
    %1909 = vmatprep.subr.mxu0 0.0
    %1910 = vmatpush1.msra.mxu0 0.0
    %1911 = vmatprep.subr.mxu0 0.0
    %1912 = vmatpush1.msra.mxu0 0.0
    %1913 = vmatprep.subr.mxu0 0.0
    %1914 = vmatpush1.msra.mxu0 0.0
    %1915 = vmatprep.subr.mxu0 0.0
    %1916 = vmatpush1.msra.mxu0 0.0
    %1917 = vmatprep.subr.mxu0 0.0
    %1918 = vmatpush1.msra.mxu0 0.0
    %1919 = vmatprep.subr.mxu0 0.0
    %1920 = vmatpush1.msra.mxu0 0.0
    %1921 = vmatprep.subr.mxu0 0.0
    %1922 = vmatpush1.msra.mxu0 0.0
    %1923 = vmatprep.mubr.f32.mxu0 0.0
    %1924 = vmatmul.mubr.f32.gmra.mrb[0].mxu0 %v1785
    %v1925 = vpop.f32.mrb[0].mxu0
    %v1926 = vadd.f32 0.0, %v1925
    %v1927 = vpop.f32.mrb[0].mxu0
    %1928 = vdwg.mxu0
    %v1929 = vadd.f32 %v223, %v1855
    %v1930 = vxor.u32 %v1929, 2147483648
    %v1931 = vmul.f32 %v1930, 1.442695
    %v1932 = vpow.pop %v1931
    %v1933 = vadd.f32 %v1932, 1.0
    %v1934 = vrcp.pop %v1933
    %v1935 = vmul.f32 1.0, %v1934
    %v1936 = vadd.f32 %v225, %v1857
    %v1937 = vxor.u32 %v1936, 2147483648
    %v1938 = vmul.f32 %v1937, 1.442695
    %v1939 = vpow.pop %v1938
    %v1940 = vadd.f32 %v1939, 1.0
    %v1941 = vrcp.pop %v1940
    %v1942 = vmul.f32 1.0, %v1941
    %v1943 = vadd.f32 %v1926, %v302
    %v1944 = vmul.f32 %v1935, %v1943
    %v1945 = vadd.f32 %v294, %v1944
    %v1946 = vtanh.pop %v1945
    %v1947 = vsub.f32 1.0, %v1942
    %v1948 = vmul.f32 %v1947, %v1946
    %v1949 = vmul.f32 %v1942, %v1785
    %v1950 = vadd.f32 %v1948, %v1949
    %s1951 = scalar_lea.vmem [#allocation2], 72
    %1952 = vst [vmem:[%s1951] sm:$0xff] %v1950
    %v1953 = vld [vmem:[#allocation2] sm:$0xff]
    %v1954 = vld [vmem:[#allocation2 + $0x8] sm:$0xff]
    %v1955 = vld [vmem:[#allocation2 + $0x10] sm:$0xff]
    %v1956 = vld [vmem:[#allocation2 + $0x18] sm:$0xff]
    %v1957 = vld [vmem:[#allocation2 + $0x20] sm:$0xff]
    %v1958 = vld [vmem:[#allocation2 + $0x28] sm:$0xff]
    %v1959 = vld [vmem:[#allocation2 + $0x30] sm:$0xff]
    %v1960 = vld [vmem:[#allocation2 + $0x38] sm:$0xff]
    %v1961 = vld [vmem:[#allocation2 + $0x40] sm:$0xff]
    %v1962 = vld [vmem:[#allocation2 + $0x48] sm:$0xff]
    %v1963 = vld [vmem:[#allocation9] sm:$0xff]
    %v1964 = vld [vmem:[#allocation9 + $0x8] sm:$0xff]
    %v1965 = vld [vmem:[#allocation9 + $0x10] sm:$0xff]
    %v1966 = vld [vmem:[#allocation9 + $0x18] sm:$0xff]
    %v1967 = vld [vmem:[#allocation9 + $0x20] sm:$0xff]
    %v1968 = vld [vmem:[#allocation9 + $0x28] sm:$0xff]
    %v1969 = vld [vmem:[#allocation9 + $0x30] sm:$0xff]
    %v1970 = vld [vmem:[#allocation9 + $0x38] sm:$0xff]
    %v1971 = vld [vmem:[#allocation9 + $0x40] sm:$0xff]
    %v1972 = vld [vmem:[#allocation9 + $0x48] sm:$0xff]
    %v1973 = vld [vmem:[#allocation9 + $0x50] sm:$0xff]
    %v1974 = vld [vmem:[#allocation9 + $0x58] sm:$0xff]
    %v1975 = vld [vmem:[#allocation9 + $0x60] sm:$0xff]
    %v1976 = vld [vmem:[#allocation9 + $0x68] sm:$0xff]
    %v1977 = vld [vmem:[#allocation9 + $0x70] sm:$0xff]
    %v1978 = vld [vmem:[#allocation9 + $0x78] sm:$0xff]
    %v1979 = vld [vmem:[%s6] sm:$0x1]
    %v1981 = vlaneseq
    %v1982 = vshrl.u32 %v1981, 7
    %v1983 = vsub.s32 0, %v1982
    %v1984 = vrot.slane %v1979, %v1983
    %1986 = vmatprep.subr.mxu0 0.0
    %1987 = vmatpush1.msra.mxu0 %v1963
    %1988 = vmatprep.subr.mxu0 0.0
    %1989 = vmatpush1.msra.mxu0 %v1964
    %1990 = vmatprep.subr.mxu0 0.0
    %1991 = vmatpush1.msra.mxu0 %v1965
    %1992 = vmatprep.subr.mxu0 0.0
    %1993 = vmatpush1.msra.mxu0 %v1966
    %1994 = vmatprep.subr.mxu0 0.0
    %1995 = vmatpush1.msra.mxu0 %v1967
    %1996 = vmatprep.subr.mxu0 0.0
    %1997 = vmatpush1.msra.mxu0 %v1968
    %1998 = vmatprep.subr.mxu0 0.0
    %1999 = vmatpush1.msra.mxu0 %v1969
    %2000 = vmatprep.subr.mxu0 0.0
    %2001 = vmatpush1.msra.mxu0 %v1970
    %2002 = vmatprep.subr.mxu0 0.0
    %2003 = vmatpush1.msra.mxu0 %v1971
    %2004 = vmatprep.subr.mxu0 0.0
    %2005 = vmatpush1.msra.mxu0 %v1972
    %2006 = vmatprep.subr.mxu0 0.0
    %2007 = vmatpush1.msra.mxu0 %v1973
    %2008 = vmatprep.subr.mxu0 0.0
    %2009 = vmatpush1.msra.mxu0 %v1974
    %2010 = vmatprep.subr.mxu0 0.0
    %2011 = vmatpush1.msra.mxu0 %v1975
    %2012 = vmatprep.subr.mxu0 0.0
    %2013 = vmatpush1.msra.mxu0 %v1976
    %2014 = vmatprep.subr.mxu0 0.0
    %2015 = vmatpush1.msra.mxu0 %v1977
    %2016 = vmatprep.subr.mxu0 0.0
    %2017 = vmatpush1.msra.mxu0 %v1978
    %2018 = vmatprep.subr.mxu0 0.0
    %2019 = vmatpush1.msra.mxu0 0.0
    %2020 = vmatprep.subr.mxu0 0.0
    %2021 = vmatpush1.msra.mxu0 0.0
    %2022 = vmatprep.subr.mxu0 0.0
    %2023 = vmatpush1.msra.mxu0 0.0
    %2024 = vmatprep.subr.mxu0 0.0
    %2025 = vmatpush1.msra.mxu0 0.0
    %2026 = vmatprep.subr.mxu0 0.0
    %2027 = vmatpush1.msra.mxu0 0.0
    %2028 = vmatprep.subr.mxu0 0.0
    %2029 = vmatpush1.msra.mxu0 0.0
    %2030 = vmatprep.subr.mxu0 0.0
    %2031 = vmatpush1.msra.mxu0 0.0
    %2032 = vmatprep.subr.mxu0 0.0
    %2033 = vmatpush1.msra.mxu0 0.0
    %2034 = vmatprep.subr.mxu0 0.0
    %2035 = vmatpush1.msra.mxu0 0.0
    %2036 = vmatprep.subr.mxu0 0.0
    %2037 = vmatpush1.msra.mxu0 0.0
    %2038 = vmatprep.subr.mxu0 0.0
    %2039 = vmatpush1.msra.mxu0 0.0
    %2040 = vmatprep.subr.mxu0 0.0
    %2041 = vmatpush1.msra.mxu0 0.0
    %2042 = vmatprep.subr.mxu0 0.0
    %2043 = vmatpush1.msra.mxu0 0.0
    %2044 = vmatprep.subr.mxu0 0.0
    %2045 = vmatpush1.msra.mxu0 0.0
    %2046 = vmatprep.subr.mxu0 0.0
    %2047 = vmatpush1.msra.mxu0 0.0
    %2048 = vmatprep.subr.mxu0 0.0
    %2049 = vmatpush1.msra.mxu0 0.0
    %2050 = vmatprep.mubr.f32.mxu0 0.0
    %2051 = vmatmul.mubr.f32.gmra.mrb[0].mxu0 %v1953
    %v2052 = vpop.f32.mrb[0].mxu0
    %v2053 = vadd.f32 %v1984, %v2052
    %v2054 = vpop.f32.mrb[0].mxu0
    %2055 = vmatprep.mubr.f32.mxu0 0.0
    %2056 = vmatmul.mubr.f32.gmra.mrb[0].mxu0 %v1954
    %v2057 = vpop.f32.mrb[0].mxu0
    %v2058 = vadd.f32 %v1984, %v2057
    %v2059 = vpop.f32.mrb[0].mxu0
    %2060 = vmatprep.mubr.f32.mxu0 0.0
    %2061 = vmatmul.mubr.f32.gmra.mrb[0].mxu0 %v1955
    %v2062 = vpop.f32.mrb[0].mxu0
    %v2063 = vadd.f32 %v1984, %v2062
    %v2064 = vpop.f32.mrb[0].mxu0
    %2065 = vmatprep.mubr.f32.mxu0 0.0
    %2066 = vmatmul.mubr.f32.gmra.mrb[0].mxu0 %v1956
    %v2067 = vpop.f32.mrb[0].mxu0
    %v2068 = vadd.f32 %v1984, %v2067
    %v2069 = vpop.f32.mrb[0].mxu0
    %2070 = vmatprep.mubr.f32.mxu0 0.0
    %2071 = vmatmul.mubr.f32.gmra.mrb[0].mxu0 %v1957
    %v2072 = vpop.f32.mrb[0].mxu0
    %v2073 = vadd.f32 %v1984, %v2072
    %v2074 = vpop.f32.mrb[0].mxu0
    %2075 = vmatprep.mubr.f32.mxu0 0.0
    %2076 = vmatmul.mubr.f32.gmra.mrb[0].mxu0 %v1958
    %v2077 = vpop.f32.mrb[0].mxu0
    %v2078 = vadd.f32 %v1984, %v2077
    %v2079 = vpop.f32.mrb[0].mxu0
    %2080 = vmatprep.mubr.f32.mxu0 0.0
    %2081 = vmatmul.mubr.f32.gmra.mrb[0].mxu0 %v1959
    %v2082 = vpop.f32.mrb[0].mxu0
    %v2083 = vadd.f32 %v1984, %v2082
    %v2084 = vpop.f32.mrb[0].mxu0
    %2085 = vmatprep.mubr.f32.mxu0 0.0
    %2086 = vmatmul.mubr.f32.gmra.mrb[0].mxu0 %v1960
    %v2087 = vpop.f32.mrb[0].mxu0
    %v2088 = vadd.f32 %v1984, %v2087
    %v2089 = vpop.f32.mrb[0].mxu0
    %2090 = vmatprep.mubr.f32.mxu0 0.0
    %2091 = vmatmul.mubr.f32.gmra.mrb[0].mxu0 %v1961
    %v2092 = vpop.f32.mrb[0].mxu0
    %v2093 = vadd.f32 %v1984, %v2092
    %v2094 = vpop.f32.mrb[0].mxu0
    %2095 = vmatprep.mubr.f32.mxu0 0.0
    %2096 = vmatmul.mubr.f32.gmra.mrb[0].mxu0 %v1962
    %v2097 = vpop.f32.mrb[0].mxu0
    %v2098 = vadd.f32 %v1984, %v2097
    %v2099 = vpop.f32.mrb[0].mxu0
    %2100 = vdwg.mxu0
    %2101 = vmax.xlane.f32.xlu0 %v2053
    %v2102 = vpop.xlane.xlu0 %2101
    %2103 = vmax.xlane.f32.xlu0 %v2058
    %v2104 = vpop.xlane.xlu0 %2103
    %2105 = vmax.xlane.f32.xlu0 %v2063
    %v2106 = vpop.xlane.xlu0 %2105
    %2107 = vmax.xlane.f32.xlu0 %v2068
    %v2108 = vpop.xlane.xlu0 %2107
    %2109 = vmax.xlane.f32.xlu0 %v2073
    %v2110 = vpop.xlane.xlu0 %2109
    %2111 = vmax.xlane.f32.xlu0 %v2078
    %v2112 = vpop.xlane.xlu0 %2111
    %2113 = vmax.xlane.f32.xlu0 %v2083
    %v2114 = vpop.xlane.xlu0 %2113
    %2115 = vmax.xlane.f32.xlu0 %v2088
    %v2116 = vpop.xlane.xlu0 %2115
    %2117 = vmax.xlane.f32.xlu0 %v2093
    %v2118 = vpop.xlane.xlu0 %2117
    %2119 = vmax.xlane.f32.xlu0 %v2098
    %v2120 = vpop.xlane.xlu0 %2119
    %v2121 = vsub.f32 %v2053, %v2102
    %v2122 = vsub.f32 %v2058, %v2104
    %v2123 = vsub.f32 %v2063, %v2106
    %v2124 = vsub.f32 %v2068, %v2108
    %v2125 = vsub.f32 %v2073, %v2110
    %v2126 = vsub.f32 %v2078, %v2112
    %v2127 = vsub.f32 %v2083, %v2114
    %v2128 = vsub.f32 %v2088, %v2116
    %v2129 = vsub.f32 %v2093, %v2118
    %v2130 = vsub.f32 %v2098, %v2120
    %v2131 = vmul.f32 %v2121, 1.442695
    %v2132 = vpow.pop %v2131
    %v2133 = vmul.f32 %v2122, 1.442695
    %v2134 = vpow.pop %v2133
    %v2135 = vmul.f32 %v2123, 1.442695
    %v2136 = vpow.pop %v2135
    %v2137 = vmul.f32 %v2124, 1.442695
    %v2138 = vpow.pop %v2137
    %v2139 = vmul.f32 %v2125, 1.442695
    %v2140 = vpow.pop %v2139
    %v2141 = vmul.f32 %v2126, 1.442695
    %v2142 = vpow.pop %v2141
    %v2143 = vmul.f32 %v2127, 1.442695
    %v2144 = vpow.pop %v2143
    %v2145 = vmul.f32 %v2128, 1.442695
    %v2146 = vpow.pop %v2145
    %v2147 = vmul.f32 %v2129, 1.442695
    %v2148 = vpow.pop %v2147
    %v2149 = vmul.f32 %v2130, 1.442695
    %v2150 = vpow.pop %v2149
    %2151 = vadd.xlane.f32.xlu0 %v2132
    %v2152 = vpop.xlane.xlu0 %2151
    %2153 = vadd.xlane.f32.xlu0 %v2134
    %v2154 = vpop.xlane.xlu0 %2153
    %2155 = vadd.xlane.f32.xlu0 %v2136
    %v2156 = vpop.xlane.xlu0 %2155
    %2157 = vadd.xlane.f32.xlu0 %v2138
    %v2158 = vpop.xlane.xlu0 %2157
    %2159 = vadd.xlane.f32.xlu0 %v2140
    %v2160 = vpop.xlane.xlu0 %2159
    %2161 = vadd.xlane.f32.xlu0 %v2142
    %v2162 = vpop.xlane.xlu0 %2161
    %2163 = vadd.xlane.f32.xlu0 %v2144
    %v2164 = vpop.xlane.xlu0 %2163
    %2165 = vadd.xlane.f32.xlu0 %v2146
    %v2166 = vpop.xlane.xlu0 %2165
    %2167 = vadd.xlane.f32.xlu0 %v2148
    %v2168 = vpop.xlane.xlu0 %2167
    %2169 = vadd.xlane.f32.xlu0 %v2150
    %v2170 = vpop.xlane.xlu0 %2169
    %v2171 = vlog2.pop %v2152
    %v2172 = vmul.f32 %v2171, 0.6931472
    %v2173 = vlog2.pop %v2154
    %v2174 = vmul.f32 %v2173, 0.6931472
    %v2175 = vlog2.pop %v2156
    %v2176 = vmul.f32 %v2175, 0.6931472
    %v2177 = vlog2.pop %v2158
    %v2178 = vmul.f32 %v2177, 0.6931472
    %v2179 = vlog2.pop %v2160
    %v2180 = vmul.f32 %v2179, 0.6931472
    %v2181 = vlog2.pop %v2162
    %v2182 = vmul.f32 %v2181, 0.6931472
    %v2183 = vlog2.pop %v2164
    %v2184 = vmul.f32 %v2183, 0.6931472
    %v2185 = vlog2.pop %v2166
    %v2186 = vmul.f32 %v2185, 0.6931472
    %v2187 = vlog2.pop %v2168
    %v2188 = vmul.f32 %v2187, 0.6931472
    %v2189 = vlog2.pop %v2170
    %v2190 = vmul.f32 %v2189, 0.6931472
    %v2191 = vadd.f32 %v2172, %v2102
    %v2192 = vadd.f32 %v2174, %v2104
    %v2193 = vadd.f32 %v2176, %v2106
    %v2194 = vadd.f32 %v2178, %v2108
    %v2195 = vadd.f32 %v2180, %v2110
    %v2196 = vadd.f32 %v2182, %v2112
    %v2197 = vadd.f32 %v2184, %v2114
    %v2198 = vadd.f32 %v2186, %v2116
    %v2199 = vadd.f32 %v2188, %v2118
    %v2200 = vadd.f32 %v2190, %v2120
    %v2201 = vsub.f32 %v2053, %v2191
    %v2202 = vsub.f32 %v2058, %v2192
    %v2203 = vsub.f32 %v2063, %v2193
    %v2204 = vsub.f32 %v2068, %v2194
    %v2205 = vsub.f32 %v2073, %v2195
    %v2206 = vsub.f32 %v2078, %v2196
    %v2207 = vsub.f32 %v2083, %v2197
    %v2208 = vsub.f32 %v2088, %v2198
    %v2209 = vsub.f32 %v2093, %v2199
    %v2210 = vsub.f32 %v2098, %v2200
    %2211 = vst [vmem:[#allocation11] sm:$0xff] %v2201
    %2212 = vst [vmem:[#allocation11 + $0x8] sm:$0xff] %v2202
    %2213 = vst [vmem:[#allocation11 + $0x10] sm:$0xff] %v2203
    %2214 = vst [vmem:[#allocation11 + $0x18] sm:$0xff] %v2204
    %2215 = vst [vmem:[#allocation11 + $0x20] sm:$0xff] %v2205
    %2216 = vst [vmem:[#allocation11 + $0x28] sm:$0xff] %v2206
    %2217 = vst [vmem:[#allocation11 + $0x30] sm:$0xff] %v2207
    %2218 = vst [vmem:[#allocation11 + $0x38] sm:$0xff] %v2208
    %2219 = vst [vmem:[#allocation11 + $0x40] sm:$0xff] %v2209
    %2220 = vst [vmem:[#allocation11 + $0x48] sm:$0xff] %v2210
    // Predicated region
    $region46: #{tpu_custom_call.1} parent=1 // pred_check
      _
    $region47: #{tpu_custom_call.1} parent=1 // pred_check_branch
      %2222 = sbr.rel (0) target = $region49
    $region48: #{tpu_custom_call.1} parent=1 // pred_region
      %s2224 = ssub.s32 1280, 1280
      %2225 = vsyncadd [#allocation5], %s2224
      %s2226 = sshll.u32 [#allocation11], 4
      %s2227 = int_to_ptr.vmem [resolvable:$true] %s2226
      %2232 = dma.vmem_to_hbm [thread:$0]  %s2227, 1280, %s7, [#allocation5], 128, 128, 8
    $region49: #{tpu_custom_call.1} parent=1 // pred_fallthru
      _
    // Predicated region
    $region50: #{tpu_custom_call.1} parent=1 // pred_check
      _
    $region51: #{tpu_custom_call.1} parent=1 // pred_check_branch
      %2234 = sbr.rel (0) target = $region53
    $region52: #{tpu_custom_call.1} parent=1 // pred_region
      %2235 = dma.done [#allocation5], 1280
    $region53: #{tpu_custom_call.1} parent=1 // pred_fallthru
      _
    %2236 = vsyncpa [#allocation4], 1
    %2237 = vsyncpa [#allocation7], 1
    %2238 = vsyncpa [#allocation10], 1
    %2239 = vsyncpa [#allocation5], 1

</llo_original>
